<compile_context>
chip_gen: v7x
topology: tpu7x:2x2x1
jax: 0.10.0
libtpu: 0.0.40
codegen_flags: <defaults>
</compile_context>

<pallas_src>
import functools

import jax
import jax.numpy as jnp
from jax.experimental import pallas as pl
from jax.experimental.pallas import tpu as pltpu

K_NEIGHBORS = 8


def _lig_linear_kernel(xloc_ref, lat_ref, wgt_ref,
                       w1x_ref, w1l_ref, w2_ref, g3_ref,
                       b1_ref, b2_ref, b3_ref,
                       out_ref):
    """One point-tile: fused decoder MLP for all 8 neighbors + weighted sum.

    The neighbor axis lives along lanes (block-diagonal weights).  Neighbors
    are processed `group` at a time so the block-diagonal matmuls match the
    MXU width of the current chip generation (group=8 -> K=N=256 on v6e/v7x,
    group=4 -> K=N=128 twice on v5e-class MXUs).
    """
    group = g3_ref.shape[1]                    # neighbors per MXU group
    n_groups = wgt_ref.shape[1] // group       # 8 // group
    gh = w2_ref.shape[1]                       # group * hidden_dim
    gc = w1l_ref.shape[0]                      # group * code_len

    # In-kernel bf16 cast of the loaded tile (no wrapper-side HBM cast pass).
    x = xloc_ref[...].astype(jnp.bfloat16)     # (tp, 8*3)
    w = wgt_ref[...].astype(jnp.float32)       # (tp, 8)

    # layer-1 xloc contribution for all 8 neighbors at once (K=24 -> cheap on
    # any MXU generation; keeps the per-group slices lane aligned).
    h1x = jnp.dot(x, w1x_ref[...], preferred_element_type=jnp.float32)  # (tp, 8*H)

    acc = None
    for gi in range(n_groups):
        # layer 1: relu(cat(xloc, lat) @ W1 + b1) for this neighbor group.
        l_g = lat_ref[:, gi * gc:(gi + 1) * gc].astype(jnp.bfloat16)    # (tp, g*C)
        h1 = (jnp.dot(l_g, w1l_ref[...], preferred_element_type=jnp.float32)
              + h1x[:, gi * gh:(gi + 1) * gh]
              + b1_ref[...])                                            # (tp, g*H)
        h1 = jnp.maximum(h1, 0.0).astype(jnp.bfloat16)

        # layer 2: relu(h1 @ W2 + b2) (block-diagonal W2).
        h2 = (jnp.dot(h1, w2_ref[...], preferred_element_type=jnp.float32)
              + b2_ref[...])                                            # (tp, g*H)
        h2 = jnp.maximum(h2, 0.0).astype(jnp.bfloat16)

        # layer 3 folded with the per-neighbor gather: g[p, k] = h2_{p,k} @ W3.
        g = jnp.dot(h2, g3_ref[...], preferred_element_type=jnp.float32)  # (tp, g)

        # trilinear interpolation for this group: sum_k w_k * (g_k + b3).
        vw = (g + b3_ref[...]) * w[:, gi * group:(gi + 1) * group]        # (tp, g)
        part = jnp.sum(vw, axis=1, keepdims=True)                         # (tp, 1)
        acc = part if acc is None else acc + part

    out_ref[...] = acc                          # (tp, 1) f32


def _block_diag(m, reps):
    """(a, b) -> (reps*a, reps*b) block-diagonal replication of m."""
    a, b = m.shape
    eye = jnp.eye(reps, dtype=m.dtype)
    return (eye[:, None, :, None] * m[None, :, None, :]).reshape(reps * a, reps * b)


def _round_up(a, b):
    return ((a + b - 1) // b) * b


def _default_group(hdim):
    """Neighbors per block-diag matmul, sized to the local MXU width."""
    try:
        kind = jax.devices()[0].device_kind.lower()
    except Exception:  # pragma: no cover - defensive
        kind = ""
    mxu_width = 256 if ("v6" in kind or "v7" in kind) else 128
    g = max(1, min(K_NEIGHBORS, mxu_width // max(int(hdim), 1)))
    while K_NEIGHBORS % g != 0:
        g -= 1
    return g


def lig_linear_forward(lat, weights, xloc, params, *, tp=2048, group=None,
                       interp=True, vmem_limit_bytes=48 * 1024 * 1024):
    """JAX/Pallas equivalent of Linear.forward (interp=True).

    Args:
      lat:     (bs, npoints, 8, code_len) neighbor latent codes (f32 or bf16)
      weights: (bs, npoints, 8)           trilinear interpolation weights
      xloc:    (bs, npoints, 8, 3)        relative local coordinates
      params:  decoder MLP weights W1,b1,W2,b2,W3,b3 (IM-Net style ReLU MLP)
      tp:      point-tile size (rounded to a multiple of 128); the grid is
               forced to have >=4 tiles when there is enough work.
      group:   neighbors per block-diagonal matmul (None = auto from MXU
               width: 8 on v6e/v7x, 4 on 128-wide MXUs).
    Returns:
      (bs, npoints, 1) f32
    """
    assert interp, "only interp=True is implemented in the Pallas kernel"

    bs, npoints, k, code_len = lat.shape
    assert k == K_NEIGHBORS
    assert xloc.shape == (bs, npoints, k, 3)
    assert weights.shape == (bs, npoints, k)

    w1, b1 = params["W1"], params["b1"]
    w2, b2 = params["W2"], params["b2"]
    w3, b3 = params["W3"], params["b3"]
    din, hdim = w1.shape
    assert din == 3 + code_len
    if group is None:
        group = _default_group(hdim)
    assert K_NEIGHBORS % group == 0

    # --- block-diagonal decoder weights (tiny, built once per call) ---------
    w1x_bd = _block_diag(w1[:3], k).astype(jnp.bfloat16)           # (8*3,  8*H)
    w1l_bd = _block_diag(w1[3:], group).astype(jnp.bfloat16)       # (g*C,  g*H)
    w2_bd = _block_diag(w2, group).astype(jnp.bfloat16)            # (g*H,  g*H)
    g3 = (jnp.eye(group, dtype=w3.dtype)[:, None, :]
          * w3[None, :, 0:1]).reshape(group * hdim, group).astype(jnp.bfloat16)
    b1_t = jnp.tile(b1.reshape(1, hdim), (1, group)).astype(jnp.float32)  # (1, g*H)
    b2_t = jnp.tile(b2.reshape(1, hdim), (1, group)).astype(jnp.float32)  # (1, g*H)
    b3_r = b3.reshape(1, 1).astype(jnp.float32)                           # (1, 1)

    # --- point-major flat views: free reshapes, NO casts, NO padding copy ---
    n = bs * npoints
    xloc_flat = xloc.reshape(n, k * 3)
    lat_flat = lat.reshape(n, k * code_len)
    wgt_flat = weights.reshape(n, k)

    if n < 8:  # degenerate tiny inputs: pad rows up to one sublane
        pad = 8 - n
        xloc_flat = jnp.pad(xloc_flat, ((0, pad), (0, 0)))
        lat_flat = jnp.pad(lat_flat, ((0, pad), (0, 0)))
        wgt_flat = jnp.pad(wgt_flat, ((0, pad), (0, 0)))
    n_rows = max(n, 8)

    # --- tiling: big tiles, but >=4 grid steps when possible (megacore) -----
    tp = max(128, _round_up(tp, 128))
    tp_cap = max(128, _round_up(pl.cdiv(n_rows, 4), 128))
    tp_eff = max(8, min(tp, tp_cap, (n_rows // 8) * 8))
    num_tiles = pl.cdiv(n_rows, tp_eff)        # last block may be partial

    def data_spec(width):
        return pl.BlockSpec((tp_eff, width), lambda i: (i, 0))

    def full_spec(shape):
        return pl.BlockSpec(shape, lambda i: (0,) * len(shape))

    out = pl.pallas_call(
        _lig_linear_kernel,
        out_shape=jax.ShapeDtypeStruct((n_rows, 1), jnp.float32),
        grid=(num_tiles,),
        in_specs=[
            data_spec(k * 3),                       # xloc
            data_spec(k * code_len),                # lat
            data_spec(k),                           # interp weights
            full_spec((k * 3, k * hdim)),           # W1 coord part (8-neighbor bd)
            full_spec((group * code_len, group * hdim)),  # W1 latent part (group bd)
            full_spec((group * hdim, group * hdim)),      # W2 (group bd)
            full_spec((group * hdim, group)),             # W3 folded gather
            full_spec((1, group * hdim)),           # b1 tiled
            full_spec((1, group * hdim)),           # b2 tiled
            full_spec((1, 1)),                      # b3
        ],
        out_specs=pl.BlockSpec((tp_eff, 1), lambda i: (i, 0)),
        compiler_params=pltpu.CompilerParams(
            dimension_semantics=("parallel",),      # shard tiles over TCs on megacore
            vmem_limit_bytes=vmem_limit_bytes),
    )(xloc_flat, lat_flat, wgt_flat,
      w1x_bd, w1l_bd, w2_bd, g3, b1_t, b2_t, b3_r)

    return out[:n].reshape(bs, npoints, 1)


def reference_forward(lat, weights, xloc, params):
    """Pure-JAX f32 reference mirroring the PyTorch forward."""
    feat = jnp.concatenate([xloc, lat], axis=3)
    h = jnp.maximum(feat @ params["W1"] + params["b1"], 0.0)
    h = jnp.maximum(h @ params["W2"] + params["b2"], 0.0)
    v = h @ params["W3"] + params["b3"]                 # (bs, np, 8, 1)
    return jnp.sum(v * weights[..., None], axis=2)      # (bs, np, 1)


def reference_forward_matched(lat, weights, xloc, params):
    """Precision-matched reference (bf16 matmul inputs, f32 accumulation)."""
    bf = jnp.bfloat16
    bs, npoints, k, c = lat.shape
    x = xloc.reshape(-1, 3).astype(bf)
    l = lat.reshape(-1, c).astype(bf)
    w1 = params["W1"].astype(bf)
    h1 = (jnp.dot(x, w1[:3], preferred_element_type=jnp.float32)
          + jnp.dot(l, w1[3:], preferred_element_type=jnp.float32)
          + params["b1"])
    h1 = jnp.maximum(h1, 0.0).astype(bf)
    h2 = (jnp.dot(h1, params["W2"].astype(bf), preferred_element_type=jnp.float32)
          + params["b2"])
    h2 = jnp.maximum(h2, 0.0).astype(bf)
    v = (jnp.dot(h2, params["W3"].astype(bf), preferred_element_type=jnp.float32)
         + params["b3"])
    v = v.reshape(bs, npoints, k, 1)
    return jnp.sum(v * weights[..., None], axis=2)


def make_decoder_params(key, din, hdim):
    k1, k2, k3 = jax.random.split(key, 3)
    scale = 0.1
    return {
        "W1": scale * jax.random.normal(k1, (din, hdim), jnp.float32),
        "b1": jnp.zeros((1, hdim), jnp.float32),
        "W2": scale * jax.random.normal(k2, (hdim, hdim), jnp.float32),
        "b2": jnp.zeros((1, hdim), jnp.float32),
        "W3": scale * jax.random.normal(k3, (hdim, 1), jnp.float32),
        "b3": jnp.zeros((1, 1), jnp.float32),
    }


if __name__ == "__main__":
    # npoints deliberately NOT a multiple of 128 so the partial-block path and
    # multi-tile grid are exercised.
    bs, npoints, code_len, hdim = 2, 100, 32, 32
    din = 3 + code_len

    key = jax.random.PRNGKey(0)
    k_lat, k_w, k_x, k_p = jax.random.split(key, 4)

    lat = jax.random.normal(k_lat, (bs, npoints, 8, code_len), jnp.float32)
    raw_w = jax.random.uniform(k_w, (bs, npoints, 8), jnp.float32)
    weights = raw_w / jnp.sum(raw_w, axis=-1, keepdims=True)   # trilinear weights
    xloc = jax.random.uniform(k_x, (bs, npoints, 8, 3), jnp.float32,
                              minval=-1.0, maxval=1.0)
    params = make_decoder_params(k_p, din, hdim)

    ref_matched = reference_forward_matched(lat, weights, xloc, params)
    ref_f32 = reference_forward(lat, weights, xloc, params)

    # Test the auto (MXU-width-derived) group and the other group size, so both
    # the single-group (v6e/v7x) and two-group (v5e-class) code paths are run.
    g_auto = _default_group(hdim)
    other_group = 4 if g_auto == 8 else 8
    for grp in (None, other_group):
        fwd = jax.jit(functools.partial(lig_linear_forward, tp=2048, group=grp))
        out = fwd(lat, weights, xloc, params)
        jax.block_until_ready(out)

        assert out.shape == (bs, npoints, 1)
        err_m = float(jnp.max(jnp.abs(out - ref_matched)))
        err_f = float(jnp.max(jnp.abs(out - ref_f32)))
        assert jnp.allclose(out, ref_matched, atol=2e-4, rtol=1e-3), (grp, err_m)
        assert jnp.allclose(out, ref_f32, atol=2e-2, rtol=2e-2), (grp, err_f)

    print("KERNEL_OK")
</pallas_src>

<mosaic_0001>
module attributes {stable_mosaic.version = 11 : i64} {
  func.func @_lig_linear_kernel(%arg0: i32, %arg1: memref<128x24xf32, #tpu.memory_space<vmem>>, %arg2: memref<128x256xf32, #tpu.memory_space<vmem>>, %arg3: memref<128x8xf32, #tpu.memory_space<vmem>>, %arg4: memref<24x256xbf16, #tpu.memory_space<vmem>>, %arg5: memref<128x128xbf16, #tpu.memory_space<vmem>>, %arg6: memref<128x128xbf16, #tpu.memory_space<vmem>>, %arg7: memref<128x4xbf16, #tpu.memory_space<vmem>>, %arg8: memref<1x128xf32, #tpu.memory_space<vmem>>, %arg9: memref<1x128xf32, #tpu.memory_space<vmem>>, %arg10: memref<1x1xf32, #tpu.memory_space<vmem>>, %arg11: memref<128x1xf32, #tpu.memory_space<vmem>>) attributes {dimension_semantics = [#tpu.dimension_semantics<parallel>], iteration_bounds = array<i64: 2>, scalar_prefetch = 0 : i64, scratch_operands = 0 : i64, tpu.core_type = #tpu.core_type<tc>, window_params = [{transform_indices = @transform_0, window_bounds = array<i64: 128, 24>}, {transform_indices = @transform_1, window_bounds = array<i64: 128, 256>}, {transform_indices = @transform_2, window_bounds = array<i64: 128, 8>}, {pipeline_mode = #tpu.pipeline_mode<synchronous>, transform_indices = @transform_3, window_bounds = array<i64: 24, 256>}, {pipeline_mode = #tpu.pipeline_mode<synchronous>, transform_indices = @transform_4, window_bounds = array<i64: 128, 128>}, {pipeline_mode = #tpu.pipeline_mode<synchronous>, transform_indices = @transform_5, window_bounds = array<i64: 128, 128>}, {pipeline_mode = #tpu.pipeline_mode<synchronous>, transform_indices = @transform_6, window_bounds = array<i64: 128, 4>}, {pipeline_mode = #tpu.pipeline_mode<synchronous>, transform_indices = @transform_7, window_bounds = array<i64: 1, 128>}, {pipeline_mode = #tpu.pipeline_mode<synchronous>, transform_indices = @transform_8, window_bounds = array<i64: 1, 128>}, {pipeline_mode = #tpu.pipeline_mode<synchronous>, transform_indices = @transform_9, window_bounds = array<i64: 1, 1>}, {transform_indices = @transform_10, window_bounds = array<i64: 128, 1>}]} {
    %c0 = arith.constant 0 : index
    %c0_0 = arith.constant 0 : index
    %0 = vector.load %arg1[%c0, %c0_0] : memref<128x24xf32, #tpu.memory_space<vmem>>, vector<128x24xf32>
    %1 = arith.truncf %0 : vector<128x24xf32> to vector<128x24xbf16>
    %c0_1 = arith.constant 0 : index
    %c0_2 = arith.constant 0 : index
    %2 = vector.load %arg3[%c0_1, %c0_2] : memref<128x8xf32, #tpu.memory_space<vmem>>, vector<128x8xf32>
    %c0_3 = arith.constant 0 : index
    %c0_4 = arith.constant 0 : index
    %3 = vector.load %arg4[%c0_3, %c0_4] : memref<24x256xbf16, #tpu.memory_space<vmem>>, vector<24x256xbf16>
    %cst = arith.constant dense<0.000000e+00> : vector<128x256xf32>
    %4 = tpu.matmul %1, %3, %cst {dimension_numbers = #tpu.dot_dimension_numbers<[1], [0], [0], [1], [0, 0, 1, 1], [], []>} : vector<128x24xbf16>, vector<24x256xbf16>, vector<128x256xf32> -> vector<128x256xf32>
    %c0_5 = arith.constant 0 : index
    %c0_6 = arith.constant 0 : index
    %5 = vector.load %arg2[%c0_5, %c0_6] : memref<128x256xf32, #tpu.memory_space<vmem>>, vector<128x128xf32>
    %6 = arith.truncf %5 : vector<128x128xf32> to vector<128x128xbf16>
    %c0_7 = arith.constant 0 : index
    %c0_8 = arith.constant 0 : index
    %7 = vector.load %arg5[%c0_7, %c0_8] : memref<128x128xbf16, #tpu.memory_space<vmem>>, vector<128x128xbf16>
    %cst_9 = arith.constant dense<0.000000e+00> : vector<128x128xf32>
    %8 = tpu.matmul %6, %7, %cst_9 {dimension_numbers = #tpu.dot_dimension_numbers<[1], [0], [0], [1], [0, 0, 1, 1], [], []>} : vector<128x128xbf16>, vector<128x128xbf16>, vector<128x128xf32> -> vector<128x128xf32>
    %9 = vector.extract_strided_slice %4 {offsets = [0, 0], sizes = [128, 128], strides = [1, 1]} : vector<128x256xf32> to vector<128x128xf32>
    %10 = arith.addf %8, %9 : vector<128x128xf32>
    %c0_10 = arith.constant 0 : index
    %c0_11 = arith.constant 0 : index
    %11 = vector.load %arg8[%c0_10, %c0_11] : memref<1x128xf32, #tpu.memory_space<vmem>>, vector<1x128xf32>
    %12 = vector.broadcast %11 : vector<1x128xf32> to vector<128x128xf32>
    %13 = arith.addf %10, %12 : vector<128x128xf32>
    %cst_12 = arith.constant 0.000000e+00 : f32
    %14 = vector.broadcast %cst_12 : f32 to vector<128x128xf32>
    %15 = arith.maximumf %13, %14 : vector<128x128xf32>
    %16 = arith.truncf %15 : vector<128x128xf32> to vector<128x128xbf16>
    %c0_13 = arith.constant 0 : index
    %c0_14 = arith.constant 0 : index
    %17 = vector.load %arg6[%c0_13, %c0_14] : memref<128x128xbf16, #tpu.memory_space<vmem>>, vector<128x128xbf16>
    %cst_15 = arith.constant dense<0.000000e+00> : vector<128x128xf32>
    %18 = tpu.matmul %16, %17, %cst_15 {dimension_numbers = #tpu.dot_dimension_numbers<[1], [0], [0], [1], [0, 0, 1, 1], [], []>} : vector<128x128xbf16>, vector<128x128xbf16>, vector<128x128xf32> -> vector<128x128xf32>
    %c0_16 = arith.constant 0 : index
    %c0_17 = arith.constant 0 : index
    %19 = vector.load %arg9[%c0_16, %c0_17] : memref<1x128xf32, #tpu.memory_space<vmem>>, vector<1x128xf32>
    %20 = vector.broadcast %19 : vector<1x128xf32> to vector<128x128xf32>
    %21 = arith.addf %18, %20 : vector<128x128xf32>
    %cst_18 = arith.constant 0.000000e+00 : f32
    %22 = vector.broadcast %cst_18 : f32 to vector<128x128xf32>
    %23 = arith.maximumf %21, %22 : vector<128x128xf32>
    %24 = arith.truncf %23 : vector<128x128xf32> to vector<128x128xbf16>
    %c0_19 = arith.constant 0 : index
    %c0_20 = arith.constant 0 : index
    %25 = vector.load %arg7[%c0_19, %c0_20] : memref<128x4xbf16, #tpu.memory_space<vmem>>, vector<128x4xbf16>
    %cst_21 = arith.constant dense<0.000000e+00> : vector<128x4xf32>
    %26 = tpu.matmul %24, %25, %cst_21 {dimension_numbers = #tpu.dot_dimension_numbers<[1], [0], [0], [1], [0, 0, 1, 1], [], []>} : vector<128x128xbf16>, vector<128x4xbf16>, vector<128x4xf32> -> vector<128x4xf32>
    %c0_22 = arith.constant 0 : index
    %c0_23 = arith.constant 0 : index
    %27 = vector.load %arg10[%c0_22, %c0_23] : memref<1x1xf32, #tpu.memory_space<vmem>>, vector<1x1xf32>
    %28 = vector.broadcast %27 : vector<1x1xf32> to vector<128x4xf32>
    %29 = arith.addf %26, %28 : vector<128x4xf32>
    %30 = vector.extract_strided_slice %2 {offsets = [0, 0], sizes = [128, 4], strides = [1, 1]} : vector<128x8xf32> to vector<128x4xf32>
    %31 = arith.mulf %29, %30 : vector<128x4xf32>
    %cst_24 = arith.constant dense<0.000000e+00> : vector<128xf32>
    %32 = vector.multi_reduction <add>, %31, %cst_24 [1] : vector<128x4xf32> to vector<128xf32>
    %33 = vector.shape_cast %32 : vector<128xf32> to vector<128x1xf32>
    %c0_25 = arith.constant 0 : index
    %c128 = arith.constant 128 : index
    %34 = vector.load %arg2[%c0_25, %c128] : memref<128x256xf32, #tpu.memory_space<vmem>>, vector<128x128xf32>
    %35 = arith.truncf %34 : vector<128x128xf32> to vector<128x128xbf16>
    %c0_26 = arith.constant 0 : index
    %c0_27 = arith.constant 0 : index
    %36 = vector.load %arg5[%c0_26, %c0_27] : memref<128x128xbf16, #tpu.memory_space<vmem>>, vector<128x128xbf16>
    %cst_28 = arith.constant dense<0.000000e+00> : vector<128x128xf32>
    %37 = tpu.matmul %35, %36, %cst_28 {dimension_numbers = #tpu.dot_dimension_numbers<[1], [0], [0], [1], [0, 0, 1, 1], [], []>} : vector<128x128xbf16>, vector<128x128xbf16>, vector<128x128xf32> -> vector<128x128xf32>
    %38 = vector.extract_strided_slice %4 {offsets = [0, 128], sizes = [128, 128], strides = [1, 1]} : vector<128x256xf32> to vector<128x128xf32>
    %39 = arith.addf %37, %38 : vector<128x128xf32>
    %c0_29 = arith.constant 0 : index
    %c0_30 = arith.constant 0 : index
    %40 = vector.load %arg8[%c0_29, %c0_30] : memref<1x128xf32, #tpu.memory_space<vmem>>, vector<1x128xf32>
    %41 = vector.broadcast %40 : vector<1x128xf32> to vector<128x128xf32>
    %42 = arith.addf %39, %41 : vector<128x128xf32>
    %cst_31 = arith.constant 0.000000e+00 : f32
    %43 = vector.broadcast %cst_31 : f32 to vector<128x128xf32>
    %44 = arith.maximumf %42, %43 : vector<128x128xf32>
    %45 = arith.truncf %44 : vector<128x128xf32> to vector<128x128xbf16>
    %c0_32 = arith.constant 0 : index
    %c0_33 = arith.constant 0 : index
    %46 = vector.load %arg6[%c0_32, %c0_33] : memref<128x128xbf16, #tpu.memory_space<vmem>>, vector<128x128xbf16>
    %cst_34 = arith.constant dense<0.000000e+00> : vector<128x128xf32>
    %47 = tpu.matmul %45, %46, %cst_34 {dimension_numbers = #tpu.dot_dimension_numbers<[1], [0], [0], [1], [0, 0, 1, 1], [], []>} : vector<128x128xbf16>, vector<128x128xbf16>, vector<128x128xf32> -> vector<128x128xf32>
    %c0_35 = arith.constant 0 : index
    %c0_36 = arith.constant 0 : index
    %48 = vector.load %arg9[%c0_35, %c0_36] : memref<1x128xf32, #tpu.memory_space<vmem>>, vector<1x128xf32>
    %49 = vector.broadcast %48 : vector<1x128xf32> to vector<128x128xf32>
    %50 = arith.addf %47, %49 : vector<128x128xf32>
    %cst_37 = arith.constant 0.000000e+00 : f32
    %51 = vector.broadcast %cst_37 : f32 to vector<128x128xf32>
    %52 = arith.maximumf %50, %51 : vector<128x128xf32>
    %53 = arith.truncf %52 : vector<128x128xf32> to vector<128x128xbf16>
    %c0_38 = arith.constant 0 : index
    %c0_39 = arith.constant 0 : index
    %54 = vector.load %arg7[%c0_38, %c0_39] : memref<128x4xbf16, #tpu.memory_space<vmem>>, vector<128x4xbf16>
    %cst_40 = arith.constant dense<0.000000e+00> : vector<128x4xf32>
    %55 = tpu.matmul %53, %54, %cst_40 {dimension_numbers = #tpu.dot_dimension_numbers<[1], [0], [0], [1], [0, 0, 1, 1], [], []>} : vector<128x128xbf16>, vector<128x4xbf16>, vector<128x4xf32> -> vector<128x4xf32>
    %c0_41 = arith.constant 0 : index
    %c0_42 = arith.constant 0 : index
    %56 = vector.load %arg10[%c0_41, %c0_42] : memref<1x1xf32, #tpu.memory_space<vmem>>, vector<1x1xf32>
    %57 = vector.broadcast %56 : vector<1x1xf32> to vector<128x4xf32>
    %58 = arith.addf %55, %57 : vector<128x4xf32>
    %59 = vector.extract_strided_slice %2 {offsets = [0, 4], sizes = [128, 4], strides = [1, 1]} : vector<128x8xf32> to vector<128x4xf32>
    %60 = arith.mulf %58, %59 : vector<128x4xf32>
    %cst_43 = arith.constant dense<0.000000e+00> : vector<128xf32>
    %61 = vector.multi_reduction <add>, %60, %cst_43 [1] : vector<128x4xf32> to vector<128xf32>
    %62 = vector.shape_cast %61 : vector<128xf32> to vector<128x1xf32>
    %63 = arith.addf %33, %62 : vector<128x1xf32>
    %c0_44 = arith.constant 0 : index
    %c0_45 = arith.constant 0 : index
    %64 = vector.load %arg11[%c0_44, %c0_45] : memref<128x1xf32, #tpu.memory_space<vmem>>, vector<128x1xf32>
    tpu.vector_store %arg11[%c0_44, %c0_45], %63 {strides = array<i32>} : memref<128x1xf32, #tpu.memory_space<vmem>>, vector<128x1xf32>,
    return
  }
  func.func @transform_0(%arg0: i32) -> (i32, i32) {
    %c0_i32 = arith.constant 0 : i32
    %c0_i32_0 = arith.constant 0 : i32
    return %arg0, %c0_i32 : i32, i32
  }
  func.func @transform_1(%arg0: i32) -> (i32, i32) {
    %c0_i32 = arith.constant 0 : i32
    %c0_i32_0 = arith.constant 0 : i32
    return %arg0, %c0_i32 : i32, i32
  }
  func.func @transform_2(%arg0: i32) -> (i32, i32) {
    %c0_i32 = arith.constant 0 : i32
    %c0_i32_0 = arith.constant 0 : i32
    return %arg0, %c0_i32 : i32, i32
  }
  func.func @transform_3(%arg0: i32) -> (i32, i32) {
    %c0_i32 = arith.constant 0 : i32
    %c0_i32_0 = arith.constant 0 : i32
    %c0_i32_1 = arith.constant 0 : i32
    return %c0_i32, %c0_i32_0 : i32, i32
  }
  func.func @transform_4(%arg0: i32) -> (i32, i32) {
    %c0_i32 = arith.constant 0 : i32
    %c0_i32_0 = arith.constant 0 : i32
    %c0_i32_1 = arith.constant 0 : i32
    return %c0_i32, %c0_i32_0 : i32, i32
  }
  func.func @transform_5(%arg0: i32) -> (i32, i32) {
    %c0_i32 = arith.constant 0 : i32
    %c0_i32_0 = arith.constant 0 : i32
    %c0_i32_1 = arith.constant 0 : i32
    return %c0_i32, %c0_i32_0 : i32, i32
  }
  func.func @transform_6(%arg0: i32) -> (i32, i32) {
    %c0_i32 = arith.constant 0 : i32
    %c0_i32_0 = arith.constant 0 : i32
    %c0_i32_1 = arith.constant 0 : i32
    return %c0_i32, %c0_i32_0 : i32, i32
  }
  func.func @transform_7(%arg0: i32) -> (i32, i32) {
    %c0_i32 = arith.constant 0 : i32
    %c0_i32_0 = arith.constant 0 : i32
    %c0_i32_1 = arith.constant 0 : i32
    return %c0_i32, %c0_i32_0 : i32, i32
  }
  func.func @transform_8(%arg0: i32) -> (i32, i32) {
    %c0_i32 = arith.constant 0 : i32
    %c0_i32_0 = arith.constant 0 : i32
    %c0_i32_1 = arith.constant 0 : i32
    return %c0_i32, %c0_i32_0 : i32, i32
  }
  func.func @transform_9(%arg0: i32) -> (i32, i32) {
    %c0_i32 = arith.constant 0 : i32
    %c0_i32_0 = arith.constant 0 : i32
    %c0_i32_1 = arith.constant 0 : i32
    return %c0_i32, %c0_i32_0 : i32, i32
  }
  func.func @transform_10(%arg0: i32) -> (i32, i32) {
    %c0_i32 = arith.constant 0 : i32
    %c0_i32_0 = arith.constant 0 : i32
    return %arg0, %c0_i32 : i32, i32
  }
}

</mosaic_0001>

<llo_original>
// kernel: lig_linear_forward.1
$region0: #{lig_linear_forward.1}
  #allocation0 [shape = 'u32[]', space=smem, size = 0x4, offset = 0x4, fixed_abs, tag = 'smem constant byte address 0x4 - core index']
  #allocation1 [shape = 'u32[144,128]{1,0:T(1,128)}', space=vmem, size = 0x12000, scoped, tag = 'internal scratch']
  #allocation2 [shape = 'f32[1,1]{1,0:T(1,128)S(1)}', space=vmem, size = 0x200, scoped, tag = 'scoped memory for lig_linear_forward.1']
  %s0 = inlined_call_operand.vmem [shape: f32[200,24], index: 0, kind: input, shape index: {}]
  %s1 = inlined_call_operand.vmem [shape: f32[200,256], index: 1, kind: input, shape index: {}]
  %s2 = inlined_call_operand.vmem [shape: f32[200,8], index: 2, kind: input, shape index: {}]
  %s3 = inlined_call_operand.vmem [shape: bf16[24,256], index: 3, kind: input, shape index: {}]
  %s4 = inlined_call_operand.vmem [shape: bf16[128,128], index: 4, kind: input, shape index: {}]
  %s5 = inlined_call_operand.vmem [shape: bf16[128,128], index: 5, kind: input, shape index: {}]
  %s6 = inlined_call_operand.vmem [shape: bf16[128,4], index: 6, kind: input, shape index: {}]
  %s7 = inlined_call_operand.vmem [shape: f32[1,128], index: 7, kind: input, shape index: {}]
  %s8 = inlined_call_operand.vmem [shape: f32[1,128], index: 8, kind: input, shape index: {}]
  %s9 = inlined_call_operand.<no memory space> [shape: f32[1,1], index: 9, kind: input, shape index: {}]
  %s10 = inlined_call_operand.vmem [shape: f32[200,1], index: 10, kind: output, shape index: {}]
  %s11 = sld [smem:[#allocation0]]
  $region121: #{lig_linear_forward.1} parent=0
    _
  %s13 = ssub.s32 1, %s11
  %s14 = scalar_select 0, %s13, %s11
  %v15 = vstv %s9
  %16 = vst [vmem:[#allocation2] sm:$0x1] %v15
  $region1: #{lig_linear_forward.1} parent=0
    #allocation3 [shape = 'u8[131072]{0}', space=vmem, size = 0x20000, scoped, tag = 'output window, operand 0']
    loop: start=0, step=1, limit=4
    $region2: #{lig_linear_forward.1} parent=1 // loop_pre_header
      _
    $region3: #{lig_linear_forward.1} parent=1 // loop_header
      %s18 = sphi 0, %s22
      %p19 = scmp.ge.s32.totalorder %s18, 4
      %s28 = sphi 0, %s30
      %s31 = sphi 0, %s28
      %s32 = sphi 0, %s31
      %s48 = sphi 0, %s32
      %s54 = sphi 0, %s56
      %s57 = sphi 0, %s54
      %s58 = sphi 0, %s57
      %s74 = sphi 0, %s58
      %s80 = sphi 0, %s82
      %s83 = sphi 0, %s80
      %s84 = sphi 0, %s83
      %s100 = sphi 0, %s84
      %s104 = sphi 0, %s104
      %s106 = sphi 0, %s104
      %s107 = sphi 0, %s106
      %s121 = sphi 0, %s107
      %s125 = sphi 0, %s125
      %s127 = sphi 0, %s125
      %s128 = sphi 0, %s127
      %s142 = sphi 0, %s128
      %s146 = sphi 0, %s146
      %s148 = sphi 0, %s146
      %s149 = sphi 0, %s148
      %s163 = sphi 0, %s149
      %s167 = sphi 0, %s167
      %s169 = sphi 0, %s167
      %s170 = sphi 0, %s169
      %s184 = sphi 0, %s170
      %s188 = sphi 0, %s188
      %s190 = sphi 0, %s188
      %s191 = sphi 0, %s190
      %s205 = sphi 0, %s191
      %s209 = sphi 0, %s209
      %s211 = sphi 0, %s209
      %s212 = sphi 0, %s211
      %s226 = sphi 0, %s212
      %s230 = sphi 0, %s230
      %s232 = sphi 0, %s230
      %s233 = sphi 0, %s232
      %s247 = sphi 0, %s233
      %s253 = sphi 0, %s255
      %s256 = sphi 0, %s253
      %s257 = sphi 0, %s256
      %s273 = sphi 0, %s257
    $region4: #{lig_linear_forward.1} parent=1 // loop_header_branch
      %21 = sbr.rel (%p19) target = $region8
    $region5: #{lig_linear_forward.1} parent=1 // loop_body
      %s23 = ssub.s32 %s18, 1
      %s24 = ssub.s32 %s18, 2
      %s25 = sadd.s32 %s18, 1
      %s26 = ssub.s32 %s18, %s25
      %p27 = scmp.eq.s32.totalorder %s26, 0
      %s29 = sadd.s32 %s28, 1
      %s30 = scalar_select %p27, %s28, %s29
      %p33 = pneg %p27
      %p34 = scmp.eq.s32.totalorder %s18, 1
      %p35 = por %p33, %p34
      %p36 = scmp.ne.s32.totalorder %s28, %s31
      %p37 = scmp.eq.s32.totalorder %s18, 0
      %p38 = por %p36, %p37
      %p39 = scmp.ne.s32.totalorder %s28, %s31
      %p40 = scmp.eq.s32.totalorder %s23, 1
      %p41 = por %p39, %p40
      %p42 = scmp.ne.s32.totalorder %s31, %s32
      %p43 = scmp.eq.s32.totalorder %s23, 0
      %p44 = por %p42, %p43
      %p45 = scmp.ne.s32.totalorder %s31, %s32
      %p46 = scmp.eq.s32.totalorder %s24, 1
      %p47 = por %p45, %p46
      %p49 = scmp.ne.s32.totalorder %s32, %s48
      %p50 = scmp.eq.s32.totalorder %s24, 0
      %p51 = por %p49, %p50
      %s52 = ssub.s32 %s18, %s25
      %p53 = scmp.eq.s32.totalorder %s52, 0
      %s55 = sadd.s32 %s54, 1
      %s56 = scalar_select %p53, %s54, %s55
      %p59 = pneg %p53
      %p60 = scmp.eq.s32.totalorder %s18, 1
      %p61 = por %p59, %p60
      %p62 = scmp.ne.s32.totalorder %s54, %s57
      %p63 = scmp.eq.s32.totalorder %s18, 0
      %p64 = por %p62, %p63
      %p65 = scmp.ne.s32.totalorder %s54, %s57
      %p66 = scmp.eq.s32.totalorder %s23, 1
      %p67 = por %p65, %p66
      %p68 = scmp.ne.s32.totalorder %s57, %s58
      %p69 = scmp.eq.s32.totalorder %s23, 0
      %p70 = por %p68, %p69
      %p71 = scmp.ne.s32.totalorder %s57, %s58
      %p72 = scmp.eq.s32.totalorder %s24, 1
      %p73 = por %p71, %p72
      %p75 = scmp.ne.s32.totalorder %s58, %s74
      %p76 = scmp.eq.s32.totalorder %s24, 0
      %p77 = por %p75, %p76
      %s78 = ssub.s32 %s18, %s25
      %p79 = scmp.eq.s32.totalorder %s78, 0
      %s81 = sadd.s32 %s80, 1
      %s82 = scalar_select %p79, %s80, %s81
      %p85 = pneg %p79
      %p86 = scmp.eq.s32.totalorder %s18, 1
      %p87 = por %p85, %p86
      %p88 = scmp.ne.s32.totalorder %s80, %s83
      %p89 = scmp.eq.s32.totalorder %s18, 0
      %p90 = por %p88, %p89
      %p91 = scmp.ne.s32.totalorder %s80, %s83
      %p92 = scmp.eq.s32.totalorder %s23, 1
      %p93 = por %p91, %p92
      %p94 = scmp.ne.s32.totalorder %s83, %s84
      %p95 = scmp.eq.s32.totalorder %s23, 0
      %p96 = por %p94, %p95
      %p97 = scmp.ne.s32.totalorder %s83, %s84
      %p98 = scmp.eq.s32.totalorder %s24, 1
      %p99 = por %p97, %p98
      %p101 = scmp.ne.s32.totalorder %s84, %s100
      %p102 = scmp.eq.s32.totalorder %s24, 0
      %p103 = por %p101, %p102
      %s105 = sadd.s32 %s104, 1
      %p108 = scmp.eq.s32.totalorder %s18, 1
      %p109 = scmp.ne.s32.totalorder %s104, %s106
      %p110 = scmp.eq.s32.totalorder %s18, 0
      %p111 = por %p109, %p110
      %p112 = scmp.ne.s32.totalorder %s104, %s106
      %p113 = scmp.eq.s32.totalorder %s23, 1
      %p114 = por %p112, %p113
      %p115 = scmp.ne.s32.totalorder %s106, %s107
      %p116 = scmp.eq.s32.totalorder %s23, 0
      %p117 = por %p115, %p116
      %p118 = scmp.ne.s32.totalorder %s106, %s107
      %p119 = scmp.eq.s32.totalorder %s24, 1
      %p120 = por %p118, %p119
      %p122 = scmp.ne.s32.totalorder %s107, %s121
      %p123 = scmp.eq.s32.totalorder %s24, 0
      %p124 = por %p122, %p123
      %s126 = sadd.s32 %s125, 1
      %p129 = scmp.eq.s32.totalorder %s18, 1
      %p130 = scmp.ne.s32.totalorder %s125, %s127
      %p131 = scmp.eq.s32.totalorder %s18, 0
      %p132 = por %p130, %p131
      %p133 = scmp.ne.s32.totalorder %s125, %s127
      %p134 = scmp.eq.s32.totalorder %s23, 1
      %p135 = por %p133, %p134
      %p136 = scmp.ne.s32.totalorder %s127, %s128
      %p137 = scmp.eq.s32.totalorder %s23, 0
      %p138 = por %p136, %p137
      %p139 = scmp.ne.s32.totalorder %s127, %s128
      %p140 = scmp.eq.s32.totalorder %s24, 1
      %p141 = por %p139, %p140
      %p143 = scmp.ne.s32.totalorder %s128, %s142
      %p144 = scmp.eq.s32.totalorder %s24, 0
      %p145 = por %p143, %p144
      %s147 = sadd.s32 %s146, 1
      %p150 = scmp.eq.s32.totalorder %s18, 1
      %p151 = scmp.ne.s32.totalorder %s146, %s148
      %p152 = scmp.eq.s32.totalorder %s18, 0
      %p153 = por %p151, %p152
      %p154 = scmp.ne.s32.totalorder %s146, %s148
      %p155 = scmp.eq.s32.totalorder %s23, 1
      %p156 = por %p154, %p155
      %p157 = scmp.ne.s32.totalorder %s148, %s149
      %p158 = scmp.eq.s32.totalorder %s23, 0
      %p159 = por %p157, %p158
      %p160 = scmp.ne.s32.totalorder %s148, %s149
      %p161 = scmp.eq.s32.totalorder %s24, 1
      %p162 = por %p160, %p161
      %p164 = scmp.ne.s32.totalorder %s149, %s163
      %p165 = scmp.eq.s32.totalorder %s24, 0
      %p166 = por %p164, %p165
      %s168 = sadd.s32 %s167, 1
      %p171 = scmp.eq.s32.totalorder %s18, 1
      %p172 = scmp.ne.s32.totalorder %s167, %s169
      %p173 = scmp.eq.s32.totalorder %s18, 0
      %p174 = por %p172, %p173
      %p175 = scmp.ne.s32.totalorder %s167, %s169
      %p176 = scmp.eq.s32.totalorder %s23, 1
      %p177 = por %p175, %p176
      %p178 = scmp.ne.s32.totalorder %s169, %s170
      %p179 = scmp.eq.s32.totalorder %s23, 0
      %p180 = por %p178, %p179
      %p181 = scmp.ne.s32.totalorder %s169, %s170
      %p182 = scmp.eq.s32.totalorder %s24, 1
      %p183 = por %p181, %p182
      %p185 = scmp.ne.s32.totalorder %s170, %s184
      %p186 = scmp.eq.s32.totalorder %s24, 0
      %p187 = por %p185, %p186
      %s189 = sadd.s32 %s188, 1
      %p192 = scmp.eq.s32.totalorder %s18, 1
      %p193 = scmp.ne.s32.totalorder %s188, %s190
      %p194 = scmp.eq.s32.totalorder %s18, 0
      %p195 = por %p193, %p194
      %p196 = scmp.ne.s32.totalorder %s188, %s190
      %p197 = scmp.eq.s32.totalorder %s23, 1
      %p198 = por %p196, %p197
      %p199 = scmp.ne.s32.totalorder %s190, %s191
      %p200 = scmp.eq.s32.totalorder %s23, 0
      %p201 = por %p199, %p200
      %p202 = scmp.ne.s32.totalorder %s190, %s191
      %p203 = scmp.eq.s32.totalorder %s24, 1
      %p204 = por %p202, %p203
      %p206 = scmp.ne.s32.totalorder %s191, %s205
      %p207 = scmp.eq.s32.totalorder %s24, 0
      %p208 = por %p206, %p207
      %s210 = sadd.s32 %s209, 1
      %p213 = scmp.eq.s32.totalorder %s18, 1
      %p214 = scmp.ne.s32.totalorder %s209, %s211
      %p215 = scmp.eq.s32.totalorder %s18, 0
      %p216 = por %p214, %p215
      %p217 = scmp.ne.s32.totalorder %s209, %s211
      %p218 = scmp.eq.s32.totalorder %s23, 1
      %p219 = por %p217, %p218
      %p220 = scmp.ne.s32.totalorder %s211, %s212
      %p221 = scmp.eq.s32.totalorder %s23, 0
      %p222 = por %p220, %p221
      %p223 = scmp.ne.s32.totalorder %s211, %s212
      %p224 = scmp.eq.s32.totalorder %s24, 1
      %p225 = por %p223, %p224
      %p227 = scmp.ne.s32.totalorder %s212, %s226
      %p228 = scmp.eq.s32.totalorder %s24, 0
      %p229 = por %p227, %p228
      %s231 = sadd.s32 %s230, 1
      %p234 = scmp.eq.s32.totalorder %s18, 1
      %p235 = scmp.ne.s32.totalorder %s230, %s232
      %p236 = scmp.eq.s32.totalorder %s18, 0
      %p237 = por %p235, %p236
      %p238 = scmp.ne.s32.totalorder %s230, %s232
      %p239 = scmp.eq.s32.totalorder %s23, 1
      %p240 = por %p238, %p239
      %p241 = scmp.ne.s32.totalorder %s232, %s233
      %p242 = scmp.eq.s32.totalorder %s23, 0
      %p243 = por %p241, %p242
      %p244 = scmp.ne.s32.totalorder %s232, %s233
      %p245 = scmp.eq.s32.totalorder %s24, 1
      %p246 = por %p244, %p245
      %p248 = scmp.ne.s32.totalorder %s233, %s247
      %p249 = scmp.eq.s32.totalorder %s24, 0
      %p250 = por %p248, %p249
      %s251 = ssub.s32 %s18, %s25
      %p252 = scmp.eq.s32.totalorder %s251, 0
      %s254 = sadd.s32 %s253, 1
      %s255 = scalar_select %p252, %s253, %s254
      %p258 = pneg %p252
      %p259 = scmp.eq.s32.totalorder %s18, 1
      %p260 = por %p258, %p259
      %p261 = scmp.ne.s32.totalorder %s253, %s256
      %p262 = scmp.eq.s32.totalorder %s18, 0
      %p263 = por %p261, %p262
      %p264 = scmp.ne.s32.totalorder %s253, %s256
      %p265 = scmp.eq.s32.totalorder %s23, 1
      %p266 = por %p264, %p265
      %p267 = scmp.ne.s32.totalorder %s256, %s257
      %p268 = scmp.eq.s32.totalorder %s23, 0
      %p269 = por %p267, %p268
      %p270 = scmp.ne.s32.totalorder %s256, %s257
      %p271 = scmp.eq.s32.totalorder %s24, 1
      %p272 = por %p270, %p271
      %p274 = scmp.ne.s32.totalorder %s257, %s273
      %p275 = scmp.eq.s32.totalorder %s24, 0
      %p276 = por %p274, %p275
      %p277 = scmp.le.s32.totalorder 1, %s18
      %p278 = scmp.lt.s32.totalorder %s18, 3
      %p279 = pnand %p277, %p278
      %p280 = pneg %p279
      // Predicated region
      $region9: #{lig_linear_forward.1} parent=5 // pred_check
        _
      $region10: #{lig_linear_forward.1} parent=5 // pred_check_branch
        %282 = sbr.rel (%p279) target = $region12
      $region11: #{lig_linear_forward.1} parent=5 // pred_region
        %s283 = ssub.s32 %s18, 1
        // Predicated region
        $region13: #{lig_linear_forward.1} parent=11 // pred_check
          %p284 = pneg %p117
        $region14: #{lig_linear_forward.1} parent=11 // pred_check_branch
          %286 = sbr.rel (%p284) target = $region16
        $region15: #{lig_linear_forward.1} parent=11 // pred_region
          _
        $region16: #{lig_linear_forward.1} parent=11 // pred_fallthru
          _
        // Predicated region
        $region17: #{lig_linear_forward.1} parent=11 // pred_check
          %p287 = pneg %p138
        $region18: #{lig_linear_forward.1} parent=11 // pred_check_branch
          %289 = sbr.rel (%p287) target = $region20
        $region19: #{lig_linear_forward.1} parent=11 // pred_region
          _
        $region20: #{lig_linear_forward.1} parent=11 // pred_fallthru
          _
        // Predicated region
        $region21: #{lig_linear_forward.1} parent=11 // pred_check
          %p290 = pneg %p159
        $region22: #{lig_linear_forward.1} parent=11 // pred_check_branch
          %292 = sbr.rel (%p290) target = $region24
        $region23: #{lig_linear_forward.1} parent=11 // pred_region
          _
        $region24: #{lig_linear_forward.1} parent=11 // pred_fallthru
          _
        // Predicated region
        $region25: #{lig_linear_forward.1} parent=11 // pred_check
          %p293 = pneg %p180
        $region26: #{lig_linear_forward.1} parent=11 // pred_check_branch
          %295 = sbr.rel (%p293) target = $region28
        $region27: #{lig_linear_forward.1} parent=11 // pred_region
          _
        $region28: #{lig_linear_forward.1} parent=11 // pred_fallthru
          _
        // Predicated region
        $region29: #{lig_linear_forward.1} parent=11 // pred_check
          %p296 = pneg %p201
        $region30: #{lig_linear_forward.1} parent=11 // pred_check_branch
          %298 = sbr.rel (%p296) target = $region32
        $region31: #{lig_linear_forward.1} parent=11 // pred_region
          _
        $region32: #{lig_linear_forward.1} parent=11 // pred_fallthru
          _
        // Predicated region
        $region33: #{lig_linear_forward.1} parent=11 // pred_check
          %p299 = pneg %p222
        $region34: #{lig_linear_forward.1} parent=11 // pred_check_branch
          %301 = sbr.rel (%p299) target = $region36
        $region35: #{lig_linear_forward.1} parent=11 // pred_region
          _
        $region36: #{lig_linear_forward.1} parent=11 // pred_fallthru
          _
        // Predicated region
        $region37: #{lig_linear_forward.1} parent=11 // pred_check
          %p302 = pneg %p243
        $region38: #{lig_linear_forward.1} parent=11 // pred_check_branch
          %304 = sbr.rel (%p302) target = $region40
        $region39: #{lig_linear_forward.1} parent=11 // pred_region
          _
        $region40: #{lig_linear_forward.1} parent=11 // pred_fallthru
          _
      $region12: #{lig_linear_forward.1} parent=5 // pred_fallthru
        _
      %p305 = scmp.lt.s32.totalorder %s18, 2
      // Predicated region
      $region41: #{lig_linear_forward.1} parent=5 // pred_check
        %p306 = pneg %p305
      $region42: #{lig_linear_forward.1} parent=5 // pred_check_branch
        %308 = sbr.rel (%p306) target = $region44
      $region43: #{lig_linear_forward.1} parent=5 // pred_region
        // Predicated region
        $region45: #{lig_linear_forward.1} parent=43 // pred_check
          %p309 = pneg %p38
        $region46: #{lig_linear_forward.1} parent=43 // pred_check_branch
          %311 = sbr.rel (%p309) target = $region48
        $region47: #{lig_linear_forward.1} parent=43 // pred_region
          %s312 = smul.u32 16, %s18
          %s313 = ssub.s32 25, %s312
          %p314 = scmp.lt.s32.totalorder %s313, 16
          %s315 = scalar_select %p314, %s313, 16
          %s316 = smul.u32 128, %s315
          %p317 = scmp.lt.s32.totalorder %s312, 24
          %s318 = scalar_select %p317, %s312, 24
          %s319 = smul.addr %s318, 8
          %s320 = scalar_lea.vmem %s0, %s319
          %s321 = smul.u32 16, %s18
          %s322 = ssub.s32 25, %s321
          %p323 = scmp.lt.s32.totalorder %s322, 16
          %s324 = scalar_select %p323, %s322, 16
          %s325 = smul.u32 128, %s324
        $region48: #{lig_linear_forward.1} parent=43 // pred_fallthru
          _
        // Predicated region
        $region49: #{lig_linear_forward.1} parent=43 // pred_check
          %p326 = pneg %p64
        $region50: #{lig_linear_forward.1} parent=43 // pred_check_branch
          %328 = sbr.rel (%p326) target = $region52
        $region51: #{lig_linear_forward.1} parent=43 // pred_region
          %s329 = smul.u32 16, %s18
          %s330 = ssub.s32 25, %s329
          %p331 = scmp.lt.s32.totalorder %s330, 16
          %s332 = scalar_select %p331, %s330, 16
          %s333 = smul.u32 128, %s332
          %s334 = smul.u32 %s333, 2
          %p335 = scmp.lt.s32.totalorder %s329, 24
          %s336 = scalar_select %p335, %s329, 24
          %s337 = smul.addr %s336, 2
          %s338 = smul.addr %s337, 8
          %s339 = scalar_lea.vmem %s1, %s338
          %s340 = smul.u32 16, %s18
          %s341 = ssub.s32 25, %s340
          %p342 = scmp.lt.s32.totalorder %s341, 16
          %s343 = scalar_select %p342, %s341, 16
          %s344 = smul.u32 128, %s343
          %s345 = smul.u32 %s344, 2
        $region52: #{lig_linear_forward.1} parent=43 // pred_fallthru
          _
        // Predicated region
        $region53: #{lig_linear_forward.1} parent=43 // pred_check
          %p346 = pneg %p90
        $region54: #{lig_linear_forward.1} parent=43 // pred_check_branch
          %348 = sbr.rel (%p346) target = $region56
        $region55: #{lig_linear_forward.1} parent=43 // pred_region
          %s349 = smul.u32 16, %s18
          %s350 = ssub.s32 25, %s349
          %p351 = scmp.lt.s32.totalorder %s350, 16
          %s352 = scalar_select %p351, %s350, 16
          %s353 = smul.u32 128, %s352
          %p354 = scmp.lt.s32.totalorder %s349, 24
          %s355 = scalar_select %p354, %s349, 24
          %s356 = smul.addr %s355, 8
          %s357 = scalar_lea.vmem %s2, %s356
          %s358 = smul.u32 16, %s18
          %s359 = ssub.s32 25, %s358
          %p360 = scmp.lt.s32.totalorder %s359, 16
          %s361 = scalar_select %p360, %s359, 16
          %s362 = smul.u32 128, %s361
        $region56: #{lig_linear_forward.1} parent=43 // pred_fallthru
          _
      $region44: #{lig_linear_forward.1} parent=5 // pred_fallthru
        _
      %p363 = scmp.le.s32.totalorder 1, %s18
      %p364 = scmp.lt.s32.totalorder %s18, 3
      %p365 = pnand %p363, %p364
      %p366 = pneg %p365
      // Predicated region
      $region57: #{lig_linear_forward.1} parent=5 // pred_check
        _
      $region58: #{lig_linear_forward.1} parent=5 // pred_check_branch
        %368 = sbr.rel (%p365) target = $region60
      $region59: #{lig_linear_forward.1} parent=5 // pred_region
        %s369 = ssub.s32 %s18, 1
        %s370 = smul.u32 16, %s23
        %s371 = ssub.s32 25, %s370
        %p372 = scmp.lt.s32.totalorder %s371, 16
        %s373 = scalar_select %p372, %s371, 16
        %s374 = smul.u32 128, %s373
        %p375 = scmp.lt.s32.totalorder %s370, 24
        %s376 = scalar_select %p375, %s370, 24
        %s377 = smul.addr %s376, 8
        %s378 = scalar_lea.vmem %s0, %s377
        %p379 = pneg %p44
        %p380 = pneg %p41
        %s381 = smul.u32 16, %s23
        %s382 = ssub.s32 25, %s381
        %p383 = scmp.lt.s32.totalorder %s382, 16
        %s384 = scalar_select %p383, %s382, 16
        %s385 = smul.u32 128, %s384
        %s386 = smul.u32 %s385, 2
        %p387 = scmp.lt.s32.totalorder %s381, 24
        %s388 = scalar_select %p387, %s381, 24
        %s389 = smul.addr %s388, 2
        %s390 = smul.addr %s389, 8
        %s391 = scalar_lea.vmem %s1, %s390
        %p392 = pneg %p70
        %p393 = pneg %p67
        %s394 = smul.u32 16, %s23
        %s395 = ssub.s32 25, %s394
        %p396 = scmp.lt.s32.totalorder %s395, 16
        %s397 = scalar_select %p396, %s395, 16
        %s398 = smul.u32 128, %s397
        %p399 = scmp.lt.s32.totalorder %s394, 24
        %s400 = scalar_select %p399, %s394, 24
        %s401 = smul.addr %s400, 8
        %s402 = scalar_lea.vmem %s2, %s401
        %p403 = pneg %p96
        %p404 = pneg %p93
        %p405 = pneg %p117
        %p406 = pneg %p114
        %p407 = pneg %p138
        %p408 = pneg %p135
        %p409 = pneg %p159
        %p410 = pneg %p156
        %p411 = pneg %p180
        %p412 = pneg %p177
        %p413 = pneg %p201
        %p414 = pneg %p198
        %p415 = pneg %p222
        %p416 = pneg %p219
        %p417 = pneg %p243
        %p418 = pneg %p240
        %p419 = pneg %p269
        %p420 = pneg %p266
        %s421 = sand.u32 %s256, 1
        %s422 = sand.u32 %s256, 1
        %s423 = smul.addr %s422, 128
        %s424 = scalar_lea.vmem [#allocation3], %s423
        %s425 = smul.u32 16, %s23
        %s426 = ssub.s32 25, %s425
        %p427 = scmp.lt.s32.totalorder %s426, 16
        %s428 = scalar_select %p427, %s426, 16
        %s429 = smul.u32 128, %s428
        %p430 = scmp.lt.s32.totalorder %s425, 24
        %s431 = scalar_select %p430, %s425, 24
        %s432 = smul.addr %s431, 8
        %s433 = scalar_lea.vmem %s0, %s432
        %s434 = smul.u32 16, %s23
        %s435 = ssub.s32 25, %s434
        %p436 = scmp.lt.s32.totalorder %s435, 16
        %s437 = scalar_select %p436, %s435, 16
        %s438 = smul.u32 128, %s437
        %s439 = smul.u32 16, %s23
        %s440 = ssub.s32 25, %s439
        %p441 = scmp.lt.s32.totalorder %s440, 16
        %s442 = scalar_select %p441, %s440, 16
        %s443 = smul.u32 128, %s442
        %s444 = smul.u32 %s443, 2
        %p445 = scmp.lt.s32.totalorder %s439, 24
        %s446 = scalar_select %p445, %s439, 24
        %s447 = smul.addr %s446, 2
        %s448 = smul.addr %s447, 8
        %s449 = scalar_lea.vmem %s1, %s448
        %s450 = smul.u32 16, %s23
        %s451 = ssub.s32 25, %s450
        %p452 = scmp.lt.s32.totalorder %s451, 16
        %s453 = scalar_select %p452, %s451, 16
        %s454 = smul.u32 128, %s453
        %s455 = smul.u32 %s454, 2
        %s456 = smul.u32 16, %s23
        %s457 = ssub.s32 25, %s456
        %p458 = scmp.lt.s32.totalorder %s457, 16
        %s459 = scalar_select %p458, %s457, 16
        %s460 = smul.u32 128, %s459
        %p461 = scmp.lt.s32.totalorder %s456, 24
        %s462 = scalar_select %p461, %s456, 24
        %s463 = smul.addr %s462, 8
        %s464 = scalar_lea.vmem %s2, %s463
        %s465 = smul.u32 16, %s23
        %s466 = ssub.s32 25, %s465
        %p467 = scmp.lt.s32.totalorder %s466, 16
        %s468 = scalar_select %p467, %s466, 16
        %s469 = smul.u32 128, %s468
        %s470 = smul.u32 16, %s23
        %s471 = ssub.s32 25, %s470
        %p472 = scmp.lt.s32.totalorder %s471, 16
        %s473 = scalar_select %p472, %s471, 16
        %s474 = smul.u32 128, %s473
        %v476 = vld [vmem:[%s433] sm:$0xff]
        %v477 = vld [vmem:[%s433 + $0x8] sm:$0xff]
        %v478 = vld [vmem:[%s433 + $0x10] sm:$0xff]
        %v479 = vld [vmem:[%s433 + $0x18] sm:$0xff]
        %v480 = vld [vmem:[%s433 + $0x20] sm:$0xff]
        %v481 = vld [vmem:[%s433 + $0x28] sm:$0xff]
        %v482 = vld [vmem:[%s433 + $0x30] sm:$0xff]
        %v483 = vld [vmem:[%s433 + $0x38] sm:$0xff]
        %v484 = vld [vmem:[%s433 + $0x40] sm:$0xff]
        %v485 = vld [vmem:[%s433 + $0x48] sm:$0xff]
        %v486 = vld [vmem:[%s433 + $0x50] sm:$0xff]
        %v487 = vld [vmem:[%s433 + $0x58] sm:$0xff]
        %v488 = vld [vmem:[%s433 + $0x60] sm:$0xff]
        %v489 = vld [vmem:[%s433 + $0x68] sm:$0xff]
        %v490 = vld [vmem:[%s433 + $0x70] sm:$0xff]
        %v491 = vld [vmem:[%s433 + $0x78] sm:$0xff]
        %v492 = vpack.c.bf16 %v477, %v476
        %v493 = vpack.c.bf16 %v479, %v478
        %v494 = vpack.c.bf16 %v481, %v480
        %v495 = vpack.c.bf16 %v483, %v482
        %v496 = vpack.c.bf16 %v485, %v484
        %v497 = vpack.c.bf16 %v487, %v486
        %v498 = vpack.c.bf16 %v489, %v488
        %v499 = vpack.c.bf16 %v491, %v490
        %v500 = vld [vmem:[%s464] sm:$0xff]
        %v501 = vld [vmem:[%s464 + $0x8] sm:$0xff]
        %v502 = vld [vmem:[%s464 + $0x10] sm:$0xff]
        %v503 = vld [vmem:[%s464 + $0x18] sm:$0xff]
        %v504 = vld [vmem:[%s464 + $0x20] sm:$0xff]
        %v505 = vld [vmem:[%s464 + $0x28] sm:$0xff]
        %v506 = vld [vmem:[%s464 + $0x30] sm:$0xff]
        %v507 = vld [vmem:[%s464 + $0x38] sm:$0xff]
        %v508 = vld [vmem:[%s464 + $0x40] sm:$0xff]
        %v509 = vld [vmem:[%s464 + $0x48] sm:$0xff]
        %v510 = vld [vmem:[%s464 + $0x50] sm:$0xff]
        %v511 = vld [vmem:[%s464 + $0x58] sm:$0xff]
        %v512 = vld [vmem:[%s464 + $0x60] sm:$0xff]
        %v513 = vld [vmem:[%s464 + $0x68] sm:$0xff]
        %v514 = vld [vmem:[%s464 + $0x70] sm:$0xff]
        %v515 = vld [vmem:[%s464 + $0x78] sm:$0xff]
        %v516 = vld [vmem:[%s3] sm:$0xff]
        %v517 = vld [vmem:[%s3 + $0x8] sm:$0xff]
        %v518 = vld [vmem:[%s3 + $0x10] sm:$0xff]
        %v522 = vunpack.c.l.b16 %v516
        %v523 = vunpack.c.h.b16 %v516
        %v524 = vunpack.c.l.b16 %v517
        %v525 = vunpack.c.h.b16 %v517
        %v526 = vunpack.c.l.b16 %v518
        %v527 = vunpack.c.h.b16 %v518
        %v528 = vpack.c.b16 %v524, %v522
        %v529 = vpack.c.b16 %v525, %v523
        %v530 = vpack.c.b16 %v526, %v526
        %v531 = vpack.c.b16 %v527, %v527
        %vm534 = vcmask 195584
        %v536 = vsel %vm534, %v492, 0
        %v539 = vsel %vm534, %v493, 0
        %v542 = vsel %vm534, %v494, 0
        %v545 = vsel %vm534, %v495, 0
        %v548 = vsel %vm534, %v496, 0
        %v551 = vsel %vm534, %v497, 0
        %v554 = vsel %vm534, %v498, 0
        %v557 = vsel %vm534, %v499, 0
        %vm559 = vcmask 1043456
        %v561 = vsel %vm559, %v530, 0
        %v564 = vsel %vm559, %v531, 0
        %566 = vmatprep.subr.bf16.mxu0 %v529
        %567 = vmatpush1.bf16.msra.mxu0 %v528
        %568 = vmatprep.subr.bf16.mxu0 %v564
        %569 = vmatpush1.bf16.msra.mxu0 %v561
        %570 = vmatprep.subr.bf16.mxu0 0
        %571 = vmatpush1.bf16.msra.mxu0 0
        %572 = vmatprep.subr.bf16.mxu0 0
        %573 = vmatpush1.bf16.msra.mxu0 0
        %574 = vmatprep.subr.bf16.mxu0 0
        %575 = vmatpush1.bf16.msra.mxu0 0
        %576 = vmatprep.subr.bf16.mxu0 0
        %577 = vmatpush1.bf16.msra.mxu0 0
        %578 = vmatprep.subr.bf16.mxu0 0
        %579 = vmatpush1.bf16.msra.mxu0 0
        %580 = vmatprep.subr.bf16.mxu0 0
        %581 = vmatpush1.bf16.msra.mxu0 0
        %582 = vmatprep.subr.bf16.mxu0 0
        %583 = vmatpush1.bf16.msra.mxu0 0
        %584 = vmatprep.subr.bf16.mxu0 0
        %585 = vmatpush1.bf16.msra.mxu0 0
        %586 = vmatprep.subr.bf16.mxu0 0
        %587 = vmatpush1.bf16.msra.mxu0 0
        %588 = vmatprep.subr.bf16.mxu0 0
        %589 = vmatpush1.bf16.msra.mxu0 0
        %590 = vmatprep.subr.bf16.mxu0 0
        %591 = vmatpush1.bf16.msra.mxu0 0
        %592 = vmatprep.subr.bf16.mxu0 0
        %593 = vmatpush1.bf16.msra.mxu0 0
        %594 = vmatprep.subr.bf16.mxu0 0
        %595 = vmatpush1.bf16.msra.mxu0 0
        %596 = vmatprep.subr.bf16.mxu0 0
        %597 = vmatpush1.bf16.msra.mxu0 0
        %598 = vmatprep.mubr.bf16.mxu0 0
        %599 = vmatmul.mubr.bf16.gmra.mrb[0].mxu0 %v536
        %v600 = vpop.f32.mrb[0].mxu0
        %v601 = vadd.f32 0.0, %v600
        %v602 = vpop.f32.mrb[0].mxu0
        %v603 = vadd.f32 0.0, %v602
        %v604 = vpop.f32.mrb[0].mxu0
        %v605 = vadd.f32 0.0, %v604
        %v606 = vpop.f32.mrb[0].mxu0
        %v607 = vadd.f32 0.0, %v606
        %608 = vmatprep.mubr.bf16.mxu0 0
        %609 = vmatmul.mubr.bf16.gmra.mrb[0].mxu0 %v539
        %v610 = vpop.f32.mrb[0].mxu0
        %v611 = vadd.f32 0.0, %v610
        %v612 = vpop.f32.mrb[0].mxu0
        %v613 = vadd.f32 0.0, %v612
        %v614 = vpop.f32.mrb[0].mxu0
        %v615 = vadd.f32 0.0, %v614
        %v616 = vpop.f32.mrb[0].mxu0
        %v617 = vadd.f32 0.0, %v616
        %618 = vmatprep.mubr.bf16.mxu0 0
        %619 = vmatmul.mubr.bf16.gmra.mrb[0].mxu0 %v542
        %v620 = vpop.f32.mrb[0].mxu0
        %v621 = vadd.f32 0.0, %v620
        %v622 = vpop.f32.mrb[0].mxu0
        %v623 = vadd.f32 0.0, %v622
        %v624 = vpop.f32.mrb[0].mxu0
        %v625 = vadd.f32 0.0, %v624
        %v626 = vpop.f32.mrb[0].mxu0
        %v627 = vadd.f32 0.0, %v626
        %628 = vmatprep.mubr.bf16.mxu0 0
        %629 = vmatmul.mubr.bf16.gmra.mrb[0].mxu0 %v545
        %v630 = vpop.f32.mrb[0].mxu0
        %v631 = vadd.f32 0.0, %v630
        %v632 = vpop.f32.mrb[0].mxu0
        %v633 = vadd.f32 0.0, %v632
        %v634 = vpop.f32.mrb[0].mxu0
        %v635 = vadd.f32 0.0, %v634
        %v636 = vpop.f32.mrb[0].mxu0
        %v637 = vadd.f32 0.0, %v636
        %638 = vmatprep.mubr.bf16.mxu0 0
        %639 = vmatmul.mubr.bf16.gmra.mrb[0].mxu0 %v548
        %v640 = vpop.f32.mrb[0].mxu0
        %v641 = vadd.f32 0.0, %v640
        %v642 = vpop.f32.mrb[0].mxu0
        %v643 = vadd.f32 0.0, %v642
        %v644 = vpop.f32.mrb[0].mxu0
        %v645 = vadd.f32 0.0, %v644
        %v646 = vpop.f32.mrb[0].mxu0
        %v647 = vadd.f32 0.0, %v646
        %648 = vmatprep.mubr.bf16.mxu0 0
        %649 = vmatmul.mubr.bf16.gmra.mrb[0].mxu0 %v551
        %v650 = vpop.f32.mrb[0].mxu0
        %v651 = vadd.f32 0.0, %v650
        %v652 = vpop.f32.mrb[0].mxu0
        %v653 = vadd.f32 0.0, %v652
        %v654 = vpop.f32.mrb[0].mxu0
        %v655 = vadd.f32 0.0, %v654
        %v656 = vpop.f32.mrb[0].mxu0
        %v657 = vadd.f32 0.0, %v656
        %658 = vmatprep.mubr.bf16.mxu0 0
        %659 = vmatmul.mubr.bf16.gmra.mrb[0].mxu0 %v554
        %v660 = vpop.f32.mrb[0].mxu0
        %v661 = vadd.f32 0.0, %v660
        %v662 = vpop.f32.mrb[0].mxu0
        %v663 = vadd.f32 0.0, %v662
        %v664 = vpop.f32.mrb[0].mxu0
        %v665 = vadd.f32 0.0, %v664
        %v666 = vpop.f32.mrb[0].mxu0
        %v667 = vadd.f32 0.0, %v666
        %668 = vmatprep.mubr.bf16.mxu0 0
        %669 = vmatmul.mubr.bf16.gmra.mrb[0].mxu0 %v557
        %v670 = vpop.f32.mrb[0].mxu0
        %v671 = vadd.f32 0.0, %v670
        %v672 = vpop.f32.mrb[0].mxu0
        %v673 = vadd.f32 0.0, %v672
        %v674 = vpop.f32.mrb[0].mxu0
        %v675 = vadd.f32 0.0, %v674
        %v676 = vpop.f32.mrb[0].mxu0
        %v677 = vadd.f32 0.0, %v676
        %678 = vdwg.mxu0
        %v679 = vld [vmem:[%s449] sm:$0xff]
        %v680 = vld [vmem:[%s449 + $0x10] sm:$0xff]
        %v681 = vld [vmem:[%s449 + $0x20] sm:$0xff]
        %v682 = vld [vmem:[%s449 + $0x30] sm:$0xff]
        %v683 = vld [vmem:[%s449 + $0x40] sm:$0xff]
        %v684 = vld [vmem:[%s449 + $0x50] sm:$0xff]
        %v685 = vld [vmem:[%s449 + $0x60] sm:$0xff]
        %v686 = vld [vmem:[%s449 + $0x70] sm:$0xff]
        %v687 = vld [vmem:[%s449 + $0x80] sm:$0xff]
        %v688 = vld [vmem:[%s449 + $0x90] sm:$0xff]
        %v689 = vld [vmem:[%s449 + $0xa0] sm:$0xff]
        %v690 = vld [vmem:[%s449 + $0xb0] sm:$0xff]
        %v691 = vld [vmem:[%s449 + $0xc0] sm:$0xff]
        %v692 = vld [vmem:[%s449 + $0xd0] sm:$0xff]
        %v693 = vld [vmem:[%s449 + $0xe0] sm:$0xff]
        %v694 = vld [vmem:[%s449 + $0xf0] sm:$0xff]
        %v695 = vpack.c.bf16 %v680, %v679
        %v696 = vpack.c.bf16 %v682, %v681
        %v697 = vpack.c.bf16 %v684, %v683
        %v698 = vpack.c.bf16 %v686, %v685
        %v699 = vpack.c.bf16 %v688, %v687
        %v700 = vpack.c.bf16 %v690, %v689
        %v701 = vpack.c.bf16 %v692, %v691
        %v702 = vpack.c.bf16 %v694, %v693
        %v703 = vld [vmem:[%s4] sm:$0xf]
        %v704 = vld [vmem:[%s4 + $0x4] sm:$0xf]
        %v705 = vld [vmem:[%s4 + $0x8] sm:$0xf]
        %v706 = vld [vmem:[%s4 + $0xc] sm:$0xf]
        %v707 = vld [vmem:[%s4 + $0x10] sm:$0xf]
        %v708 = vld [vmem:[%s4 + $0x14] sm:$0xf]
        %v709 = vld [vmem:[%s4 + $0x18] sm:$0xf]
        %v710 = vld [vmem:[%s4 + $0x1c] sm:$0xf]
        %v711 = vld [vmem:[%s4 + $0x20] sm:$0xf]
        %v712 = vld [vmem:[%s4 + $0x24] sm:$0xf]
        %v713 = vld [vmem:[%s4 + $0x28] sm:$0xf]
        %v714 = vld [vmem:[%s4 + $0x2c] sm:$0xf]
        %v715 = vld [vmem:[%s4 + $0x30] sm:$0xf]
        %v716 = vld [vmem:[%s4 + $0x34] sm:$0xf]
        %v717 = vld [vmem:[%s4 + $0x38] sm:$0xf]
        %v718 = vld [vmem:[%s4 + $0x3c] sm:$0xf]
        %v735 = vunpack.c.l.b16 %v703
        %v736 = vunpack.c.l.b16 %v704
        %v737 = vunpack.c.l.b16 %v705
        %v738 = vunpack.c.l.b16 %v706
        %v739 = vunpack.c.l.b16 %v707
        %v740 = vunpack.c.l.b16 %v708
        %v741 = vunpack.c.l.b16 %v709
        %v742 = vunpack.c.l.b16 %v710
        %v743 = vunpack.c.l.b16 %v711
        %v744 = vunpack.c.l.b16 %v712
        %v745 = vunpack.c.l.b16 %v713
        %v746 = vunpack.c.l.b16 %v714
        %v747 = vunpack.c.l.b16 %v715
        %v748 = vunpack.c.l.b16 %v716
        %v749 = vunpack.c.l.b16 %v717
        %v750 = vunpack.c.l.b16 %v718
        %v751 = vpack.c.b16 %v736, %v735
        %v752 = vpack.c.b16 %v738, %v737
        %v753 = vpack.c.b16 %v740, %v739
        %v754 = vpack.c.b16 %v742, %v741
        %v755 = vpack.c.b16 %v744, %v743
        %v756 = vpack.c.b16 %v746, %v745
        %v757 = vpack.c.b16 %v748, %v747
        %v758 = vpack.c.b16 %v750, %v749
        %767 = vmatprep.subr.bf16.mxu0 0
        %768 = vmatpush1.bf16.msra.mxu0 %v751
        %769 = vmatprep.subr.bf16.mxu0 0
        %770 = vmatpush1.bf16.msra.mxu0 %v752
        %771 = vmatprep.subr.bf16.mxu0 0
        %772 = vmatpush1.bf16.msra.mxu0 %v753
        %773 = vmatprep.subr.bf16.mxu0 0
        %774 = vmatpush1.bf16.msra.mxu0 %v754
        %775 = vmatprep.subr.bf16.mxu0 0
        %776 = vmatpush1.bf16.msra.mxu0 %v755
        %777 = vmatprep.subr.bf16.mxu0 0
        %778 = vmatpush1.bf16.msra.mxu0 %v756
        %779 = vmatprep.subr.bf16.mxu0 0
        %780 = vmatpush1.bf16.msra.mxu0 %v757
        %781 = vmatprep.subr.bf16.mxu0 0
        %782 = vmatpush1.bf16.msra.mxu0 %v758
        %783 = vmatprep.subr.bf16.mxu0 0
        %784 = vmatpush1.bf16.msra.mxu0 0
        %785 = vmatprep.subr.bf16.mxu0 0
        %786 = vmatpush1.bf16.msra.mxu0 0
        %787 = vmatprep.subr.bf16.mxu0 0
        %788 = vmatpush1.bf16.msra.mxu0 0
        %789 = vmatprep.subr.bf16.mxu0 0
        %790 = vmatpush1.bf16.msra.mxu0 0
        %791 = vmatprep.subr.bf16.mxu0 0
        %792 = vmatpush1.bf16.msra.mxu0 0
        %793 = vmatprep.subr.bf16.mxu0 0
        %794 = vmatpush1.bf16.msra.mxu0 0
        %795 = vmatprep.subr.bf16.mxu0 0
        %796 = vmatpush1.bf16.msra.mxu0 0
        %797 = vmatprep.subr.bf16.mxu0 0
        %798 = vmatpush1.bf16.msra.mxu0 0
        %799 = vmatprep.mubr.bf16.mxu0 0
        %800 = vmatmul.mubr.bf16.gmra.mrb[0].mxu0 %v695
        %v801 = vpop.f32.mrb[0].mxu0
        %v802 = vadd.f32 %v601, %v801
        %v803 = vpop.f32.mrb[0].mxu0
        %v804 = vpop.f32.mrb[0].mxu0
        %v805 = vadd.f32 %v605, %v804
        %v806 = vpop.f32.mrb[0].mxu0
        %807 = vmatprep.mubr.bf16.mxu0 0
        %808 = vmatmul.mubr.bf16.gmra.mrb[0].mxu0 %v696
        %v809 = vpop.f32.mrb[0].mxu0
        %v810 = vadd.f32 %v611, %v809
        %v811 = vpop.f32.mrb[0].mxu0
        %v812 = vpop.f32.mrb[0].mxu0
        %v813 = vadd.f32 %v615, %v812
        %v814 = vpop.f32.mrb[0].mxu0
        %815 = vmatprep.mubr.bf16.mxu0 0
        %816 = vmatmul.mubr.bf16.gmra.mrb[0].mxu0 %v697
        %v817 = vpop.f32.mrb[0].mxu0
        %v818 = vadd.f32 %v621, %v817
        %v819 = vpop.f32.mrb[0].mxu0
        %v820 = vpop.f32.mrb[0].mxu0
        %v821 = vadd.f32 %v625, %v820
        %v822 = vpop.f32.mrb[0].mxu0
        %823 = vmatprep.mubr.bf16.mxu0 0
        %824 = vmatmul.mubr.bf16.gmra.mrb[0].mxu0 %v698
        %v825 = vpop.f32.mrb[0].mxu0
        %v826 = vadd.f32 %v631, %v825
        %v827 = vpop.f32.mrb[0].mxu0
        %v828 = vpop.f32.mrb[0].mxu0
        %v829 = vadd.f32 %v635, %v828
        %v830 = vpop.f32.mrb[0].mxu0
        %831 = vmatprep.mubr.bf16.mxu0 0
        %832 = vmatmul.mubr.bf16.gmra.mrb[0].mxu0 %v699
        %v833 = vpop.f32.mrb[0].mxu0
        %v834 = vadd.f32 %v641, %v833
        %v835 = vpop.f32.mrb[0].mxu0
        %v836 = vpop.f32.mrb[0].mxu0
        %v837 = vadd.f32 %v645, %v836
        %v838 = vpop.f32.mrb[0].mxu0
        %839 = vmatprep.mubr.bf16.mxu0 0
        %840 = vmatmul.mubr.bf16.gmra.mrb[0].mxu0 %v700
        %v841 = vpop.f32.mrb[0].mxu0
        %v842 = vadd.f32 %v651, %v841
        %v843 = vpop.f32.mrb[0].mxu0
        %v844 = vpop.f32.mrb[0].mxu0
        %v845 = vadd.f32 %v655, %v844
        %v846 = vpop.f32.mrb[0].mxu0
        %847 = vmatprep.mubr.bf16.mxu0 0
        %848 = vmatmul.mubr.bf16.gmra.mrb[0].mxu0 %v701
        %v849 = vpop.f32.mrb[0].mxu0
        %v850 = vadd.f32 %v661, %v849
        %v851 = vpop.f32.mrb[0].mxu0
        %v852 = vpop.f32.mrb[0].mxu0
        %v853 = vadd.f32 %v665, %v852
        %v854 = vpop.f32.mrb[0].mxu0
        %855 = vmatprep.mubr.bf16.mxu0 0
        %856 = vmatmul.mubr.bf16.gmra.mrb[0].mxu0 %v702
        %v857 = vpop.f32.mrb[0].mxu0
        %v858 = vadd.f32 %v671, %v857
        %v859 = vpop.f32.mrb[0].mxu0
        %v860 = vpop.f32.mrb[0].mxu0
        %v861 = vadd.f32 %v675, %v860
        %v862 = vpop.f32.mrb[0].mxu0
        %863 = vdwg.mxu0
        %v864 = vld [vmem:[%s7] sm:$0x1]
        %v866 = vlaneseq
        %v867 = vshrl.u32 %v866, 7
        %v868 = vsub.s32 0, %v867
        %v869 = vrot.slane %v864, %v868
        %v871 = vadd.f32 %v802, %v869
        %v872 = vadd.f32 %v805, %v869
        %v873 = vadd.f32 %v810, %v869
        %v874 = vadd.f32 %v813, %v869
        %v875 = vadd.f32 %v818, %v869
        %v876 = vadd.f32 %v821, %v869
        %v877 = vadd.f32 %v826, %v869
        %v878 = vadd.f32 %v829, %v869
        %v879 = vadd.f32 %v834, %v869
        %v880 = vadd.f32 %v837, %v869
        %v881 = vadd.f32 %v842, %v869
        %v882 = vadd.f32 %v845, %v869
        %v883 = vadd.f32 %v850, %v869
        %v884 = vadd.f32 %v853, %v869
        %v885 = vadd.f32 %v858, %v869
        %v886 = vadd.f32 %v861, %v869
        %v887 = vmax.f32 %v871, 0.0
        %v888 = vmax.f32 %v872, 0.0
        %v889 = vmax.f32 %v873, 0.0
        %v890 = vmax.f32 %v874, 0.0
        %v891 = vmax.f32 %v875, 0.0
        %v892 = vmax.f32 %v876, 0.0
        %v893 = vmax.f32 %v877, 0.0
        %v894 = vmax.f32 %v878, 0.0
        %v895 = vmax.f32 %v879, 0.0
        %v896 = vmax.f32 %v880, 0.0
        %v897 = vmax.f32 %v881, 0.0
        %v898 = vmax.f32 %v882, 0.0
        %v899 = vmax.f32 %v883, 0.0
        %v900 = vmax.f32 %v884, 0.0
        %v901 = vmax.f32 %v885, 0.0
        %v902 = vmax.f32 %v886, 0.0
        %v903 = vpack.c.bf16 %v888, %v887
        %v904 = vpack.c.bf16 %v890, %v889
        %v905 = vpack.c.bf16 %v892, %v891
        %v906 = vpack.c.bf16 %v894, %v893
        %v907 = vpack.c.bf16 %v896, %v895
        %v908 = vpack.c.bf16 %v898, %v897
        %v909 = vpack.c.bf16 %v900, %v899
        %v910 = vpack.c.bf16 %v902, %v901
        %v911 = vld [vmem:[%s5] sm:$0xf]
        %v912 = vld [vmem:[%s5 + $0x4] sm:$0xf]
        %v913 = vld [vmem:[%s5 + $0x8] sm:$0xf]
        %v914 = vld [vmem:[%s5 + $0xc] sm:$0xf]
        %v915 = vld [vmem:[%s5 + $0x10] sm:$0xf]
        %v916 = vld [vmem:[%s5 + $0x14] sm:$0xf]
        %v917 = vld [vmem:[%s5 + $0x18] sm:$0xf]
        %v918 = vld [vmem:[%s5 + $0x1c] sm:$0xf]
        %v919 = vld [vmem:[%s5 + $0x20] sm:$0xf]
        %v920 = vld [vmem:[%s5 + $0x24] sm:$0xf]
        %v921 = vld [vmem:[%s5 + $0x28] sm:$0xf]
        %v922 = vld [vmem:[%s5 + $0x2c] sm:$0xf]
        %v923 = vld [vmem:[%s5 + $0x30] sm:$0xf]
        %v924 = vld [vmem:[%s5 + $0x34] sm:$0xf]
        %v925 = vld [vmem:[%s5 + $0x38] sm:$0xf]
        %v926 = vld [vmem:[%s5 + $0x3c] sm:$0xf]
        %v927 = vld [vmem:[%s8] sm:$0x1]
        %v929 = vlaneseq
        %v930 = vshrl.u32 %v929, 7
        %v931 = vsub.s32 0, %v930
        %v932 = vrot.slane %v927, %v931
        %v950 = vunpack.c.l.b16 %v911
        %v951 = vunpack.c.l.b16 %v912
        %v952 = vunpack.c.l.b16 %v913
        %v953 = vunpack.c.l.b16 %v914
        %v954 = vunpack.c.l.b16 %v915
        %v955 = vunpack.c.l.b16 %v916
        %v956 = vunpack.c.l.b16 %v917
        %v957 = vunpack.c.l.b16 %v918
        %v958 = vunpack.c.l.b16 %v919
        %v959 = vunpack.c.l.b16 %v920
        %v960 = vunpack.c.l.b16 %v921
        %v961 = vunpack.c.l.b16 %v922
        %v962 = vunpack.c.l.b16 %v923
        %v963 = vunpack.c.l.b16 %v924
        %v964 = vunpack.c.l.b16 %v925
        %v965 = vunpack.c.l.b16 %v926
        %v966 = vpack.c.b16 %v951, %v950
        %v967 = vpack.c.b16 %v953, %v952
        %v968 = vpack.c.b16 %v955, %v954
        %v969 = vpack.c.b16 %v957, %v956
        %v970 = vpack.c.b16 %v959, %v958
        %v971 = vpack.c.b16 %v961, %v960
        %v972 = vpack.c.b16 %v963, %v962
        %v973 = vpack.c.b16 %v965, %v964
        %982 = vmatprep.subr.bf16.mxu0 0
        %983 = vmatpush1.bf16.msra.mxu0 %v966
        %984 = vmatprep.subr.bf16.mxu0 0
        %985 = vmatpush1.bf16.msra.mxu0 %v967
        %986 = vmatprep.subr.bf16.mxu0 0
        %987 = vmatpush1.bf16.msra.mxu0 %v968
        %988 = vmatprep.subr.bf16.mxu0 0
        %989 = vmatpush1.bf16.msra.mxu0 %v969
        %990 = vmatprep.subr.bf16.mxu0 0
        %991 = vmatpush1.bf16.msra.mxu0 %v970
        %992 = vmatprep.subr.bf16.mxu0 0
        %993 = vmatpush1.bf16.msra.mxu0 %v971
        %994 = vmatprep.subr.bf16.mxu0 0
        %995 = vmatpush1.bf16.msra.mxu0 %v972
        %996 = vmatprep.subr.bf16.mxu0 0
        %997 = vmatpush1.bf16.msra.mxu0 %v973
        %998 = vmatprep.subr.bf16.mxu0 0
        %999 = vmatpush1.bf16.msra.mxu0 0
        %1000 = vmatprep.subr.bf16.mxu0 0
        %1001 = vmatpush1.bf16.msra.mxu0 0
        %1002 = vmatprep.subr.bf16.mxu0 0
        %1003 = vmatpush1.bf16.msra.mxu0 0
        %1004 = vmatprep.subr.bf16.mxu0 0
        %1005 = vmatpush1.bf16.msra.mxu0 0
        %1006 = vmatprep.subr.bf16.mxu0 0
        %1007 = vmatpush1.bf16.msra.mxu0 0
        %1008 = vmatprep.subr.bf16.mxu0 0
        %1009 = vmatpush1.bf16.msra.mxu0 0
        %1010 = vmatprep.subr.bf16.mxu0 0
        %1011 = vmatpush1.bf16.msra.mxu0 0
        %1012 = vmatprep.subr.bf16.mxu0 0
        %1013 = vmatpush1.bf16.msra.mxu0 0
        %1014 = vmatprep.mubr.bf16.mxu0 0
        %1015 = vmatmul.mubr.bf16.gmra.mrb[0].mxu0 %v903
        %v1016 = vpop.f32.mrb[0].mxu0
        %v1017 = vadd.f32 %v932, %v1016
        %v1018 = vpop.f32.mrb[0].mxu0
        %v1019 = vpop.f32.mrb[0].mxu0
        %v1020 = vadd.f32 %v932, %v1019
        %v1021 = vpop.f32.mrb[0].mxu0
        %1022 = vmatprep.mubr.bf16.mxu0 0
        %1023 = vmatmul.mubr.bf16.gmra.mrb[0].mxu0 %v904
        %v1024 = vpop.f32.mrb[0].mxu0
        %v1025 = vadd.f32 %v932, %v1024
        %v1026 = vpop.f32.mrb[0].mxu0
        %v1027 = vpop.f32.mrb[0].mxu0
        %v1028 = vadd.f32 %v932, %v1027
        %v1029 = vpop.f32.mrb[0].mxu0
        %1030 = vmatprep.mubr.bf16.mxu0 0
        %1031 = vmatmul.mubr.bf16.gmra.mrb[0].mxu0 %v905
        %v1032 = vpop.f32.mrb[0].mxu0
        %v1033 = vadd.f32 %v932, %v1032
        %v1034 = vpop.f32.mrb[0].mxu0
        %v1035 = vpop.f32.mrb[0].mxu0
        %v1036 = vadd.f32 %v932, %v1035
        %v1037 = vpop.f32.mrb[0].mxu0
        %1038 = vmatprep.mubr.bf16.mxu0 0
        %1039 = vmatmul.mubr.bf16.gmra.mrb[0].mxu0 %v906
        %v1040 = vpop.f32.mrb[0].mxu0
        %v1041 = vadd.f32 %v932, %v1040
        %v1042 = vpop.f32.mrb[0].mxu0
        %v1043 = vpop.f32.mrb[0].mxu0
        %v1044 = vadd.f32 %v932, %v1043
        %v1045 = vpop.f32.mrb[0].mxu0
        %1046 = vmatprep.mubr.bf16.mxu0 0
        %1047 = vmatmul.mubr.bf16.gmra.mrb[0].mxu0 %v907
        %v1048 = vpop.f32.mrb[0].mxu0
        %v1049 = vadd.f32 %v932, %v1048
        %v1050 = vpop.f32.mrb[0].mxu0
        %v1051 = vpop.f32.mrb[0].mxu0
        %v1052 = vadd.f32 %v932, %v1051
        %v1053 = vpop.f32.mrb[0].mxu0
        %1054 = vmatprep.mubr.bf16.mxu0 0
        %1055 = vmatmul.mubr.bf16.gmra.mrb[0].mxu0 %v908
        %v1056 = vpop.f32.mrb[0].mxu0
        %v1057 = vadd.f32 %v932, %v1056
        %v1058 = vpop.f32.mrb[0].mxu0
        %v1059 = vpop.f32.mrb[0].mxu0
        %v1060 = vadd.f32 %v932, %v1059
        %v1061 = vpop.f32.mrb[0].mxu0
        %1062 = vmatprep.mubr.bf16.mxu0 0
        %1063 = vmatmul.mubr.bf16.gmra.mrb[0].mxu0 %v909
        %v1064 = vpop.f32.mrb[0].mxu0
        %v1065 = vadd.f32 %v932, %v1064
        %v1066 = vpop.f32.mrb[0].mxu0
        %v1067 = vpop.f32.mrb[0].mxu0
        %v1068 = vadd.f32 %v932, %v1067
        %v1069 = vpop.f32.mrb[0].mxu0
        %1070 = vmatprep.mubr.bf16.mxu0 0
        %1071 = vmatmul.mubr.bf16.gmra.mrb[0].mxu0 %v910
        %v1072 = vpop.f32.mrb[0].mxu0
        %v1073 = vadd.f32 %v932, %v1072
        %v1074 = vpop.f32.mrb[0].mxu0
        %v1075 = vpop.f32.mrb[0].mxu0
        %v1076 = vadd.f32 %v932, %v1075
        %v1077 = vpop.f32.mrb[0].mxu0
        %1078 = vdwg.mxu0
        %v1079 = vmax.f32 %v1017, 0.0
        %v1080 = vmax.f32 %v1020, 0.0
        %v1081 = vmax.f32 %v1025, 0.0
        %v1082 = vmax.f32 %v1028, 0.0
        %v1083 = vmax.f32 %v1033, 0.0
        %v1084 = vmax.f32 %v1036, 0.0
        %v1085 = vmax.f32 %v1041, 0.0
        %v1086 = vmax.f32 %v1044, 0.0
        %v1087 = vmax.f32 %v1049, 0.0
        %v1088 = vmax.f32 %v1052, 0.0
        %v1089 = vmax.f32 %v1057, 0.0
        %v1090 = vmax.f32 %v1060, 0.0
        %v1091 = vmax.f32 %v1065, 0.0
        %v1092 = vmax.f32 %v1068, 0.0
        %v1093 = vmax.f32 %v1073, 0.0
        %v1094 = vmax.f32 %v1076, 0.0
        %v1095 = vpack.c.bf16 %v1080, %v1079
        %v1096 = vpack.c.bf16 %v1082, %v1081
        %v1097 = vpack.c.bf16 %v1084, %v1083
        %v1098 = vpack.c.bf16 %v1086, %v1085
        %v1099 = vpack.c.bf16 %v1088, %v1087
        %v1100 = vpack.c.bf16 %v1090, %v1089
        %v1101 = vpack.c.bf16 %v1092, %v1091
        %v1102 = vpack.c.bf16 %v1094, %v1093
        %v1103 = vld [vmem:[%s6] sm:$0xf]
        %v1104 = vld [vmem:[%s6 + $0x4] sm:$0xf]
        %v1105 = vld [vmem:[%s6 + $0x8] sm:$0xf]
        %v1106 = vld [vmem:[%s6 + $0xc] sm:$0xf]
        %v1107 = vld [vmem:[%s6 + $0x10] sm:$0xf]
        %v1108 = vld [vmem:[%s6 + $0x14] sm:$0xf]
        %v1109 = vld [vmem:[%s6 + $0x18] sm:$0xf]
        %v1110 = vld [vmem:[%s6 + $0x1c] sm:$0xf]
        %v1111 = vld [vmem:[%s6 + $0x20] sm:$0xf]
        %v1112 = vld [vmem:[%s6 + $0x24] sm:$0xf]
        %v1113 = vld [vmem:[%s6 + $0x28] sm:$0xf]
        %v1114 = vld [vmem:[%s6 + $0x2c] sm:$0xf]
        %v1115 = vld [vmem:[%s6 + $0x30] sm:$0xf]
        %v1116 = vld [vmem:[%s6 + $0x34] sm:$0xf]
        %v1117 = vld [vmem:[%s6 + $0x38] sm:$0xf]
        %v1118 = vld [vmem:[%s6 + $0x3c] sm:$0xf]
        %v1119 = vld [vmem:[#allocation2] sm:$0x1]
        %v1121 = vlaneseq
        %v1122 = vshrl.u32 %v1121, 7
        %v1123 = vsub.s32 0, %v1122
        %v1124 = vrot.slane %v1119, %v1123
        %1125 = vset.pattern.permute.xlu0 0
        %1126 = vperm.xlu0 %1125, %v1124
        %v1127 = vpop.permute.xlu0 %1126
        %v1145 = vunpack.c.l.b16 %v1103
        %v1146 = vunpack.c.l.b16 %v1104
        %v1147 = vunpack.c.l.b16 %v1105
        %v1148 = vunpack.c.l.b16 %v1106
        %v1149 = vunpack.c.l.b16 %v1107
        %v1150 = vunpack.c.l.b16 %v1108
        %v1151 = vunpack.c.l.b16 %v1109
        %v1152 = vunpack.c.l.b16 %v1110
        %v1153 = vunpack.c.l.b16 %v1111
        %v1154 = vunpack.c.l.b16 %v1112
        %v1155 = vunpack.c.l.b16 %v1113
        %v1156 = vunpack.c.l.b16 %v1114
        %v1157 = vunpack.c.l.b16 %v1115
        %v1158 = vunpack.c.l.b16 %v1116
        %v1159 = vunpack.c.l.b16 %v1117
        %v1160 = vunpack.c.l.b16 %v1118
        %v1161 = vpack.c.b16 %v1146, %v1145
        %v1162 = vpack.c.b16 %v1148, %v1147
        %v1163 = vpack.c.b16 %v1150, %v1149
        %v1164 = vpack.c.b16 %v1152, %v1151
        %v1165 = vpack.c.b16 %v1154, %v1153
        %v1166 = vpack.c.b16 %v1156, %v1155
        %v1167 = vpack.c.b16 %v1158, %v1157
        %v1168 = vpack.c.b16 %v1160, %v1159
        %1177 = vmatprep.subr.bf16.mxu0 0
        %1178 = vmatpush1.bf16.msra.mxu0 %v1161
        %1179 = vmatprep.subr.bf16.mxu0 0
        %1180 = vmatpush1.bf16.msra.mxu0 %v1162
        %1181 = vmatprep.subr.bf16.mxu0 0
        %1182 = vmatpush1.bf16.msra.mxu0 %v1163
        %1183 = vmatprep.subr.bf16.mxu0 0
        %1184 = vmatpush1.bf16.msra.mxu0 %v1164
        %1185 = vmatprep.subr.bf16.mxu0 0
        %1186 = vmatpush1.bf16.msra.mxu0 %v1165
        %1187 = vmatprep.subr.bf16.mxu0 0
        %1188 = vmatpush1.bf16.msra.mxu0 %v1166
        %1189 = vmatprep.subr.bf16.mxu0 0
        %1190 = vmatpush1.bf16.msra.mxu0 %v1167
        %1191 = vmatprep.subr.bf16.mxu0 0
        %1192 = vmatpush1.bf16.msra.mxu0 %v1168
        %1193 = vmatprep.subr.bf16.mxu0 0
        %1194 = vmatpush1.bf16.msra.mxu0 0
        %1195 = vmatprep.subr.bf16.mxu0 0
        %1196 = vmatpush1.bf16.msra.mxu0 0
        %1197 = vmatprep.subr.bf16.mxu0 0
        %1198 = vmatpush1.bf16.msra.mxu0 0
        %1199 = vmatprep.subr.bf16.mxu0 0
        %1200 = vmatpush1.bf16.msra.mxu0 0
        %1201 = vmatprep.subr.bf16.mxu0 0
        %1202 = vmatpush1.bf16.msra.mxu0 0
        %1203 = vmatprep.subr.bf16.mxu0 0
        %1204 = vmatpush1.bf16.msra.mxu0 0
        %1205 = vmatprep.subr.bf16.mxu0 0
        %1206 = vmatpush1.bf16.msra.mxu0 0
        %1207 = vmatprep.subr.bf16.mxu0 0
        %1208 = vmatpush1.bf16.msra.mxu0 0
        %1209 = vmatprep.mubr.bf16.mxu0 0
        %1210 = vmatmul.mubr.bf16.gmra.mrb[0].mxu0 %v1095
        %v1211 = vpop.f32.mrb[0].mxu0
        %v1212 = vadd.f32 %v1127, %v1211
        %v1213 = vpop.f32.mrb[0].mxu0
        %v1214 = vpop.f32.mrb[0].mxu0
        %v1215 = vadd.f32 %v1127, %v1214
        %v1216 = vpop.f32.mrb[0].mxu0
        %1217 = vmatprep.mubr.bf16.mxu0 0
        %1218 = vmatmul.mubr.bf16.gmra.mrb[0].mxu0 %v1096
        %v1219 = vpop.f32.mrb[0].mxu0
        %v1220 = vadd.f32 %v1127, %v1219
        %v1221 = vpop.f32.mrb[0].mxu0
        %v1222 = vpop.f32.mrb[0].mxu0
        %v1223 = vadd.f32 %v1127, %v1222
        %v1224 = vpop.f32.mrb[0].mxu0
        %1225 = vmatprep.mubr.bf16.mxu0 0
        %1226 = vmatmul.mubr.bf16.gmra.mrb[0].mxu0 %v1097
        %v1227 = vpop.f32.mrb[0].mxu0
        %v1228 = vadd.f32 %v1127, %v1227
        %v1229 = vpop.f32.mrb[0].mxu0
        %v1230 = vpop.f32.mrb[0].mxu0
        %v1231 = vadd.f32 %v1127, %v1230
        %v1232 = vpop.f32.mrb[0].mxu0
        %1233 = vmatprep.mubr.bf16.mxu0 0
        %1234 = vmatmul.mubr.bf16.gmra.mrb[0].mxu0 %v1098
        %v1235 = vpop.f32.mrb[0].mxu0
        %v1236 = vadd.f32 %v1127, %v1235
        %v1237 = vpop.f32.mrb[0].mxu0
        %v1238 = vpop.f32.mrb[0].mxu0
        %v1239 = vadd.f32 %v1127, %v1238
        %v1240 = vpop.f32.mrb[0].mxu0
        %1241 = vmatprep.mubr.bf16.mxu0 0
        %1242 = vmatmul.mubr.bf16.gmra.mrb[0].mxu0 %v1099
        %v1243 = vpop.f32.mrb[0].mxu0
        %v1244 = vadd.f32 %v1127, %v1243
        %v1245 = vpop.f32.mrb[0].mxu0
        %v1246 = vpop.f32.mrb[0].mxu0
        %v1247 = vadd.f32 %v1127, %v1246
        %v1248 = vpop.f32.mrb[0].mxu0
        %1249 = vmatprep.mubr.bf16.mxu0 0
        %1250 = vmatmul.mubr.bf16.gmra.mrb[0].mxu0 %v1100
        %v1251 = vpop.f32.mrb[0].mxu0
        %v1252 = vadd.f32 %v1127, %v1251
        %v1253 = vpop.f32.mrb[0].mxu0
        %v1254 = vpop.f32.mrb[0].mxu0
        %v1255 = vadd.f32 %v1127, %v1254
        %v1256 = vpop.f32.mrb[0].mxu0
        %1257 = vmatprep.mubr.bf16.mxu0 0
        %1258 = vmatmul.mubr.bf16.gmra.mrb[0].mxu0 %v1101
        %v1259 = vpop.f32.mrb[0].mxu0
        %v1260 = vadd.f32 %v1127, %v1259
        %v1261 = vpop.f32.mrb[0].mxu0
        %v1262 = vpop.f32.mrb[0].mxu0
        %v1263 = vadd.f32 %v1127, %v1262
        %v1264 = vpop.f32.mrb[0].mxu0
        %1265 = vmatprep.mubr.bf16.mxu0 0
        %1266 = vmatmul.mubr.bf16.gmra.mrb[0].mxu0 %v1102
        %v1267 = vpop.f32.mrb[0].mxu0
        %v1268 = vadd.f32 %v1127, %v1267
        %v1269 = vpop.f32.mrb[0].mxu0
        %v1270 = vpop.f32.mrb[0].mxu0
        %v1271 = vadd.f32 %v1127, %v1270
        %v1272 = vpop.f32.mrb[0].mxu0
        %1273 = vdwg.mxu0
        %v1274 = vmul.f32 %v1212, %v500
        %v1275 = vmul.f32 %v1215, %v501
        %v1276 = vmul.f32 %v1220, %v502
        %v1277 = vmul.f32 %v1223, %v503
        %v1278 = vmul.f32 %v1228, %v504
        %v1279 = vmul.f32 %v1231, %v505
        %v1280 = vmul.f32 %v1236, %v506
        %v1281 = vmul.f32 %v1239, %v507
        %v1282 = vmul.f32 %v1244, %v508
        %v1283 = vmul.f32 %v1247, %v509
        %v1284 = vmul.f32 %v1252, %v510
        %v1285 = vmul.f32 %v1255, %v511
        %v1286 = vmul.f32 %v1260, %v512
        %v1287 = vmul.f32 %v1263, %v513
        %v1288 = vmul.f32 %v1268, %v514
        %v1289 = vmul.f32 %v1271, %v515
        %vm1290 = vcmask 31744
        %v1291 = vsel %vm1290, %v1274, 0.0
        %1292 = vadd.xlane.f32.xlu0 %v1291
        %v1293 = vpop.xlane.xlu0 %1292
        %v1294 = vsel %vm1290, %v1275, 0.0
        %1295 = vadd.xlane.f32.xlu0 %v1294
        %v1296 = vpop.xlane.xlu0 %1295
        %v1297 = vsel %vm1290, %v1276, 0.0
        %1298 = vadd.xlane.f32.xlu0 %v1297
        %v1299 = vpop.xlane.xlu0 %1298
        %v1300 = vsel %vm1290, %v1277, 0.0
        %1301 = vadd.xlane.f32.xlu0 %v1300
        %v1302 = vpop.xlane.xlu0 %1301
        %v1303 = vsel %vm1290, %v1278, 0.0
        %1304 = vadd.xlane.f32.xlu0 %v1303
        %v1305 = vpop.xlane.xlu0 %1304
        %v1306 = vsel %vm1290, %v1279, 0.0
        %1307 = vadd.xlane.f32.xlu0 %v1306
        %v1308 = vpop.xlane.xlu0 %1307
        %v1309 = vsel %vm1290, %v1280, 0.0
        %1310 = vadd.xlane.f32.xlu0 %v1309
        %v1311 = vpop.xlane.xlu0 %1310
        %v1312 = vsel %vm1290, %v1281, 0.0
        %1313 = vadd.xlane.f32.xlu0 %v1312
        %v1314 = vpop.xlane.xlu0 %1313
        %v1315 = vsel %vm1290, %v1282, 0.0
        %1316 = vadd.xlane.f32.xlu0 %v1315
        %v1317 = vpop.xlane.xlu0 %1316
        %v1318 = vsel %vm1290, %v1283, 0.0
        %1319 = vadd.xlane.f32.xlu0 %v1318
        %v1320 = vpop.xlane.xlu0 %1319
        %v1321 = vsel %vm1290, %v1284, 0.0
        %1322 = vadd.xlane.f32.xlu0 %v1321
        %v1323 = vpop.xlane.xlu0 %1322
        %v1324 = vsel %vm1290, %v1285, 0.0
        %1325 = vadd.xlane.f32.xlu0 %v1324
        %v1326 = vpop.xlane.xlu0 %1325
        %v1327 = vsel %vm1290, %v1286, 0.0
        %1328 = vadd.xlane.f32.xlu0 %v1327
        %v1329 = vpop.xlane.xlu0 %1328
        %v1330 = vsel %vm1290, %v1287, 0.0
        %1331 = vadd.xlane.f32.xlu0 %v1330
        %v1332 = vpop.xlane.xlu0 %1331
        %v1333 = vsel %vm1290, %v1288, 0.0
        %1334 = vadd.xlane.f32.xlu0 %v1333
        %v1335 = vpop.xlane.xlu0 %1334
        %v1336 = vsel %vm1290, %v1289, 0.0
        %1337 = vadd.xlane.f32.xlu0 %v1336
        %v1338 = vpop.xlane.xlu0 %1337
        %v1339 = vld [vmem:[%s449 + $0x8] sm:$0xff]
        %v1340 = vld [vmem:[%s449 + $0x18] sm:$0xff]
        %v1341 = vld [vmem:[%s449 + $0x28] sm:$0xff]
        %v1342 = vld [vmem:[%s449 + $0x38] sm:$0xff]
        %v1343 = vld [vmem:[%s449 + $0x48] sm:$0xff]
        %v1344 = vld [vmem:[%s449 + $0x58] sm:$0xff]
        %v1345 = vld [vmem:[%s449 + $0x68] sm:$0xff]
        %v1346 = vld [vmem:[%s449 + $0x78] sm:$0xff]
        %v1347 = vld [vmem:[%s449 + $0x88] sm:$0xff]
        %v1348 = vld [vmem:[%s449 + $0x98] sm:$0xff]
        %v1349 = vld [vmem:[%s449 + $0xa8] sm:$0xff]
        %v1350 = vld [vmem:[%s449 + $0xb8] sm:$0xff]
        %v1351 = vld [vmem:[%s449 + $0xc8] sm:$0xff]
        %v1352 = vld [vmem:[%s449 + $0xd8] sm:$0xff]
        %v1353 = vld [vmem:[%s449 + $0xe8] sm:$0xff]
        %v1354 = vld [vmem:[%s449 + $0xf8] sm:$0xff]
        %v1355 = vpack.c.bf16 %v1340, %v1339
        %v1356 = vpack.c.bf16 %v1342, %v1341
        %v1357 = vpack.c.bf16 %v1344, %v1343
        %v1358 = vpack.c.bf16 %v1346, %v1345
        %v1359 = vpack.c.bf16 %v1348, %v1347
        %v1360 = vpack.c.bf16 %v1350, %v1349
        %v1361 = vpack.c.bf16 %v1352, %v1351
        %v1362 = vpack.c.bf16 %v1354, %v1353
        %1363 = vmatprep.subr.bf16.mxu0 0
        %1364 = vmatpush1.bf16.msra.mxu0 %v751
        %1365 = vmatprep.subr.bf16.mxu0 0
        %1366 = vmatpush1.bf16.msra.mxu0 %v752
        %1367 = vmatprep.subr.bf16.mxu0 0
        %1368 = vmatpush1.bf16.msra.mxu0 %v753
        %1369 = vmatprep.subr.bf16.mxu0 0
        %1370 = vmatpush1.bf16.msra.mxu0 %v754
        %1371 = vmatprep.subr.bf16.mxu0 0
        %1372 = vmatpush1.bf16.msra.mxu0 %v755
        %1373 = vmatprep.subr.bf16.mxu0 0
        %1374 = vmatpush1.bf16.msra.mxu0 %v756
        %1375 = vmatprep.subr.bf16.mxu0 0
        %1376 = vmatpush1.bf16.msra.mxu0 %v757
        %1377 = vmatprep.subr.bf16.mxu0 0
        %1378 = vmatpush1.bf16.msra.mxu0 %v758
        %1379 = vmatprep.subr.bf16.mxu0 0
        %1380 = vmatpush1.bf16.msra.mxu0 0
        %1381 = vmatprep.subr.bf16.mxu0 0
        %1382 = vmatpush1.bf16.msra.mxu0 0
        %1383 = vmatprep.subr.bf16.mxu0 0
        %1384 = vmatpush1.bf16.msra.mxu0 0
        %1385 = vmatprep.subr.bf16.mxu0 0
        %1386 = vmatpush1.bf16.msra.mxu0 0
        %1387 = vmatprep.subr.bf16.mxu0 0
        %1388 = vmatpush1.bf16.msra.mxu0 0
        %1389 = vmatprep.subr.bf16.mxu0 0
        %1390 = vmatpush1.bf16.msra.mxu0 0
        %1391 = vmatprep.subr.bf16.mxu0 0
        %1392 = vmatpush1.bf16.msra.mxu0 0
        %1393 = vmatprep.subr.bf16.mxu0 0
        %1394 = vmatpush1.bf16.msra.mxu0 0
        %1395 = vmatprep.mubr.bf16.mxu0 0
        %1396 = vmatmul.mubr.bf16.gmra.mrb[0].mxu0 %v1355
        %v1397 = vpop.f32.mrb[0].mxu0
        %v1398 = vadd.f32 %v603, %v1397
        %v1399 = vpop.f32.mrb[0].mxu0
        %v1400 = vpop.f32.mrb[0].mxu0
        %v1401 = vadd.f32 %v607, %v1400
        %v1402 = vpop.f32.mrb[0].mxu0
        %1403 = vmatprep.mubr.bf16.mxu0 0
        %1404 = vmatmul.mubr.bf16.gmra.mrb[0].mxu0 %v1356
        %v1405 = vpop.f32.mrb[0].mxu0
        %v1406 = vadd.f32 %v613, %v1405
        %v1407 = vpop.f32.mrb[0].mxu0
        %v1408 = vpop.f32.mrb[0].mxu0
        %v1409 = vadd.f32 %v617, %v1408
        %v1410 = vpop.f32.mrb[0].mxu0
        %1411 = vmatprep.mubr.bf16.mxu0 0
        %1412 = vmatmul.mubr.bf16.gmra.mrb[0].mxu0 %v1357
        %v1413 = vpop.f32.mrb[0].mxu0
        %v1414 = vadd.f32 %v623, %v1413
        %v1415 = vpop.f32.mrb[0].mxu0
        %v1416 = vpop.f32.mrb[0].mxu0
        %v1417 = vadd.f32 %v627, %v1416
        %v1418 = vpop.f32.mrb[0].mxu0
        %1419 = vmatprep.mubr.bf16.mxu0 0
        %1420 = vmatmul.mubr.bf16.gmra.mrb[0].mxu0 %v1358
        %v1421 = vpop.f32.mrb[0].mxu0
        %v1422 = vadd.f32 %v633, %v1421
        %v1423 = vpop.f32.mrb[0].mxu0
        %v1424 = vpop.f32.mrb[0].mxu0
        %v1425 = vadd.f32 %v637, %v1424
        %v1426 = vpop.f32.mrb[0].mxu0
        %1427 = vmatprep.mubr.bf16.mxu0 0
        %1428 = vmatmul.mubr.bf16.gmra.mrb[0].mxu0 %v1359
        %v1429 = vpop.f32.mrb[0].mxu0
        %v1430 = vadd.f32 %v643, %v1429
        %v1431 = vpop.f32.mrb[0].mxu0
        %v1432 = vpop.f32.mrb[0].mxu0
        %v1433 = vadd.f32 %v647, %v1432
        %v1434 = vpop.f32.mrb[0].mxu0
        %1435 = vmatprep.mubr.bf16.mxu0 0
        %1436 = vmatmul.mubr.bf16.gmra.mrb[0].mxu0 %v1360
        %v1437 = vpop.f32.mrb[0].mxu0
        %v1438 = vadd.f32 %v653, %v1437
        %v1439 = vpop.f32.mrb[0].mxu0
        %v1440 = vpop.f32.mrb[0].mxu0
        %v1441 = vadd.f32 %v657, %v1440
        %v1442 = vpop.f32.mrb[0].mxu0
        %1443 = vmatprep.mubr.bf16.mxu0 0
        %1444 = vmatmul.mubr.bf16.gmra.mrb[0].mxu0 %v1361
        %v1445 = vpop.f32.mrb[0].mxu0
        %v1446 = vadd.f32 %v663, %v1445
        %v1447 = vpop.f32.mrb[0].mxu0
        %v1448 = vpop.f32.mrb[0].mxu0
        %v1449 = vadd.f32 %v667, %v1448
        %v1450 = vpop.f32.mrb[0].mxu0
        %1451 = vmatprep.mubr.bf16.mxu0 0
        %1452 = vmatmul.mubr.bf16.gmra.mrb[0].mxu0 %v1362
        %v1453 = vpop.f32.mrb[0].mxu0
        %v1454 = vadd.f32 %v673, %v1453
        %v1455 = vpop.f32.mrb[0].mxu0
        %v1456 = vpop.f32.mrb[0].mxu0
        %v1457 = vadd.f32 %v677, %v1456
        %v1458 = vpop.f32.mrb[0].mxu0
        %1459 = vdwg.mxu0
        %v1460 = vadd.f32 %v1398, %v869
        %v1461 = vadd.f32 %v1401, %v869
        %v1462 = vadd.f32 %v1406, %v869
        %v1463 = vadd.f32 %v1409, %v869
        %v1464 = vadd.f32 %v1414, %v869
        %v1465 = vadd.f32 %v1417, %v869
        %v1466 = vadd.f32 %v1422, %v869
        %v1467 = vadd.f32 %v1425, %v869
        %v1468 = vadd.f32 %v1430, %v869
        %v1469 = vadd.f32 %v1433, %v869
        %v1470 = vadd.f32 %v1438, %v869
        %v1471 = vadd.f32 %v1441, %v869
        %v1472 = vadd.f32 %v1446, %v869
        %v1473 = vadd.f32 %v1449, %v869
        %v1474 = vadd.f32 %v1454, %v869
        %v1475 = vadd.f32 %v1457, %v869
        %v1476 = vmax.f32 %v1460, 0.0
        %v1477 = vmax.f32 %v1461, 0.0
        %v1478 = vmax.f32 %v1462, 0.0
        %v1479 = vmax.f32 %v1463, 0.0
        %v1480 = vmax.f32 %v1464, 0.0
        %v1481 = vmax.f32 %v1465, 0.0
        %v1482 = vmax.f32 %v1466, 0.0
        %v1483 = vmax.f32 %v1467, 0.0
        %v1484 = vmax.f32 %v1468, 0.0
        %v1485 = vmax.f32 %v1469, 0.0
        %v1486 = vmax.f32 %v1470, 0.0
        %v1487 = vmax.f32 %v1471, 0.0
        %v1488 = vmax.f32 %v1472, 0.0
        %v1489 = vmax.f32 %v1473, 0.0
        %v1490 = vmax.f32 %v1474, 0.0
        %v1491 = vmax.f32 %v1475, 0.0
        %v1492 = vpack.c.bf16 %v1477, %v1476
        %v1493 = vpack.c.bf16 %v1479, %v1478
        %v1494 = vpack.c.bf16 %v1481, %v1480
        %v1495 = vpack.c.bf16 %v1483, %v1482
        %v1496 = vpack.c.bf16 %v1485, %v1484
        %v1497 = vpack.c.bf16 %v1487, %v1486
        %v1498 = vpack.c.bf16 %v1489, %v1488
        %v1499 = vpack.c.bf16 %v1491, %v1490
        %1500 = vmatprep.subr.bf16.mxu0 0
        %1501 = vmatpush1.bf16.msra.mxu0 %v966
        %1502 = vmatprep.subr.bf16.mxu0 0
        %1503 = vmatpush1.bf16.msra.mxu0 %v967
        %1504 = vmatprep.subr.bf16.mxu0 0
        %1505 = vmatpush1.bf16.msra.mxu0 %v968
        %1506 = vmatprep.subr.bf16.mxu0 0
        %1507 = vmatpush1.bf16.msra.mxu0 %v969
        %1508 = vmatprep.subr.bf16.mxu0 0
        %1509 = vmatpush1.bf16.msra.mxu0 %v970
        %1510 = vmatprep.subr.bf16.mxu0 0
        %1511 = vmatpush1.bf16.msra.mxu0 %v971
        %1512 = vmatprep.subr.bf16.mxu0 0
        %1513 = vmatpush1.bf16.msra.mxu0 %v972
        %1514 = vmatprep.subr.bf16.mxu0 0
        %1515 = vmatpush1.bf16.msra.mxu0 %v973
        %1516 = vmatprep.subr.bf16.mxu0 0
        %1517 = vmatpush1.bf16.msra.mxu0 0
        %1518 = vmatprep.subr.bf16.mxu0 0
        %1519 = vmatpush1.bf16.msra.mxu0 0
        %1520 = vmatprep.subr.bf16.mxu0 0
        %1521 = vmatpush1.bf16.msra.mxu0 0
        %1522 = vmatprep.subr.bf16.mxu0 0
        %1523 = vmatpush1.bf16.msra.mxu0 0
        %1524 = vmatprep.subr.bf16.mxu0 0
        %1525 = vmatpush1.bf16.msra.mxu0 0
        %1526 = vmatprep.subr.bf16.mxu0 0
        %1527 = vmatpush1.bf16.msra.mxu0 0
        %1528 = vmatprep.subr.bf16.mxu0 0
        %1529 = vmatpush1.bf16.msra.mxu0 0
        %1530 = vmatprep.subr.bf16.mxu0 0
        %1531 = vmatpush1.bf16.msra.mxu0 0
        %1532 = vmatprep.mubr.bf16.mxu0 0
        %1533 = vmatmul.mubr.bf16.gmra.mrb[0].mxu0 %v1492
        %v1534 = vpop.f32.mrb[0].mxu0
        %v1535 = vadd.f32 %v932, %v1534
        %v1536 = vpop.f32.mrb[0].mxu0
        %v1537 = vpop.f32.mrb[0].mxu0
        %v1538 = vadd.f32 %v932, %v1537
        %v1539 = vpop.f32.mrb[0].mxu0
        %1540 = vmatprep.mubr.bf16.mxu0 0
        %1541 = vmatmul.mubr.bf16.gmra.mrb[0].mxu0 %v1493
        %v1542 = vpop.f32.mrb[0].mxu0
        %v1543 = vadd.f32 %v932, %v1542
        %v1544 = vpop.f32.mrb[0].mxu0
        %v1545 = vpop.f32.mrb[0].mxu0
        %v1546 = vadd.f32 %v932, %v1545
        %v1547 = vpop.f32.mrb[0].mxu0
        %1548 = vmatprep.mubr.bf16.mxu0 0
        %1549 = vmatmul.mubr.bf16.gmra.mrb[0].mxu0 %v1494
        %v1550 = vpop.f32.mrb[0].mxu0
        %v1551 = vadd.f32 %v932, %v1550
        %v1552 = vpop.f32.mrb[0].mxu0
        %v1553 = vpop.f32.mrb[0].mxu0
        %v1554 = vadd.f32 %v932, %v1553
        %v1555 = vpop.f32.mrb[0].mxu0
        %1556 = vmatprep.mubr.bf16.mxu0 0
        %1557 = vmatmul.mubr.bf16.gmra.mrb[0].mxu0 %v1495
        %v1558 = vpop.f32.mrb[0].mxu0
        %v1559 = vadd.f32 %v932, %v1558
        %v1560 = vpop.f32.mrb[0].mxu0
        %v1561 = vpop.f32.mrb[0].mxu0
        %v1562 = vadd.f32 %v932, %v1561
        %v1563 = vpop.f32.mrb[0].mxu0
        %1564 = vmatprep.mubr.bf16.mxu0 0
        %1565 = vmatmul.mubr.bf16.gmra.mrb[0].mxu0 %v1496
        %v1566 = vpop.f32.mrb[0].mxu0
        %v1567 = vadd.f32 %v932, %v1566
        %v1568 = vpop.f32.mrb[0].mxu0
        %v1569 = vpop.f32.mrb[0].mxu0
        %v1570 = vadd.f32 %v932, %v1569
        %v1571 = vpop.f32.mrb[0].mxu0
        %1572 = vmatprep.mubr.bf16.mxu0 0
        %1573 = vmatmul.mubr.bf16.gmra.mrb[0].mxu0 %v1497
        %v1574 = vpop.f32.mrb[0].mxu0
        %v1575 = vadd.f32 %v932, %v1574
        %v1576 = vpop.f32.mrb[0].mxu0
        %v1577 = vpop.f32.mrb[0].mxu0
        %v1578 = vadd.f32 %v932, %v1577
        %v1579 = vpop.f32.mrb[0].mxu0
        %1580 = vmatprep.mubr.bf16.mxu0 0
        %1581 = vmatmul.mubr.bf16.gmra.mrb[0].mxu0 %v1498
        %v1582 = vpop.f32.mrb[0].mxu0
        %v1583 = vadd.f32 %v932, %v1582
        %v1584 = vpop.f32.mrb[0].mxu0
        %v1585 = vpop.f32.mrb[0].mxu0
        %v1586 = vadd.f32 %v932, %v1585
        %v1587 = vpop.f32.mrb[0].mxu0
        %1588 = vmatprep.mubr.bf16.mxu0 0
        %1589 = vmatmul.mubr.bf16.gmra.mrb[0].mxu0 %v1499
        %v1590 = vpop.f32.mrb[0].mxu0
        %v1591 = vadd.f32 %v932, %v1590
        %v1592 = vpop.f32.mrb[0].mxu0
        %v1593 = vpop.f32.mrb[0].mxu0
        %v1594 = vadd.f32 %v932, %v1593
        %v1595 = vpop.f32.mrb[0].mxu0
        %1596 = vdwg.mxu0
        %v1597 = vmax.f32 %v1535, 0.0
        %v1598 = vmax.f32 %v1538, 0.0
        %v1599 = vmax.f32 %v1543, 0.0
        %v1600 = vmax.f32 %v1546, 0.0
        %v1601 = vmax.f32 %v1551, 0.0
        %v1602 = vmax.f32 %v1554, 0.0
        %v1603 = vmax.f32 %v1559, 0.0
        %v1604 = vmax.f32 %v1562, 0.0
        %v1605 = vmax.f32 %v1567, 0.0
        %v1606 = vmax.f32 %v1570, 0.0
        %v1607 = vmax.f32 %v1575, 0.0
        %v1608 = vmax.f32 %v1578, 0.0
        %v1609 = vmax.f32 %v1583, 0.0
        %v1610 = vmax.f32 %v1586, 0.0
        %v1611 = vmax.f32 %v1591, 0.0
        %v1612 = vmax.f32 %v1594, 0.0
        %v1613 = vpack.c.bf16 %v1598, %v1597
        %v1614 = vpack.c.bf16 %v1600, %v1599
        %v1615 = vpack.c.bf16 %v1602, %v1601
        %v1616 = vpack.c.bf16 %v1604, %v1603
        %v1617 = vpack.c.bf16 %v1606, %v1605
        %v1618 = vpack.c.bf16 %v1608, %v1607
        %v1619 = vpack.c.bf16 %v1610, %v1609
        %v1620 = vpack.c.bf16 %v1612, %v1611
        %1621 = vmatprep.subr.bf16.mxu0 0
        %1622 = vmatpush1.bf16.msra.mxu0 %v1161
        %1623 = vmatprep.subr.bf16.mxu0 0
        %1624 = vmatpush1.bf16.msra.mxu0 %v1162
        %1625 = vmatprep.subr.bf16.mxu0 0
        %1626 = vmatpush1.bf16.msra.mxu0 %v1163
        %1627 = vmatprep.subr.bf16.mxu0 0
        %1628 = vmatpush1.bf16.msra.mxu0 %v1164
        %1629 = vmatprep.subr.bf16.mxu0 0
        %1630 = vmatpush1.bf16.msra.mxu0 %v1165
        %1631 = vmatprep.subr.bf16.mxu0 0
        %1632 = vmatpush1.bf16.msra.mxu0 %v1166
        %1633 = vmatprep.subr.bf16.mxu0 0
        %1634 = vmatpush1.bf16.msra.mxu0 %v1167
        %1635 = vmatprep.subr.bf16.mxu0 0
        %1636 = vmatpush1.bf16.msra.mxu0 %v1168
        %1637 = vmatprep.subr.bf16.mxu0 0
        %1638 = vmatpush1.bf16.msra.mxu0 0
        %1639 = vmatprep.subr.bf16.mxu0 0
        %1640 = vmatpush1.bf16.msra.mxu0 0
        %1641 = vmatprep.subr.bf16.mxu0 0
        %1642 = vmatpush1.bf16.msra.mxu0 0
        %1643 = vmatprep.subr.bf16.mxu0 0
        %1644 = vmatpush1.bf16.msra.mxu0 0
        %1645 = vmatprep.subr.bf16.mxu0 0
        %1646 = vmatpush1.bf16.msra.mxu0 0
        %1647 = vmatprep.subr.bf16.mxu0 0
        %1648 = vmatpush1.bf16.msra.mxu0 0
        %1649 = vmatprep.subr.bf16.mxu0 0
        %1650 = vmatpush1.bf16.msra.mxu0 0
        %1651 = vmatprep.subr.bf16.mxu0 0
        %1652 = vmatpush1.bf16.msra.mxu0 0
        %1653 = vmatprep.mubr.bf16.mxu0 0
        %1654 = vmatmul.mubr.bf16.gmra.mrb[0].mxu0 %v1613
        %v1655 = vpop.f32.mrb[0].mxu0
        %v1656 = vadd.f32 %v1127, %v1655
        %v1657 = vpop.f32.mrb[0].mxu0
        %v1658 = vpop.f32.mrb[0].mxu0
        %v1659 = vadd.f32 %v1127, %v1658
        %v1660 = vpop.f32.mrb[0].mxu0
        %1661 = vmatprep.mubr.bf16.mxu0 0
        %1662 = vmatmul.mubr.bf16.gmra.mrb[0].mxu0 %v1614
        %v1663 = vpop.f32.mrb[0].mxu0
        %v1664 = vadd.f32 %v1127, %v1663
        %v1665 = vpop.f32.mrb[0].mxu0
        %v1666 = vpop.f32.mrb[0].mxu0
        %v1667 = vadd.f32 %v1127, %v1666
        %v1668 = vpop.f32.mrb[0].mxu0
        %1669 = vmatprep.mubr.bf16.mxu0 0
        %1670 = vmatmul.mubr.bf16.gmra.mrb[0].mxu0 %v1615
        %v1671 = vpop.f32.mrb[0].mxu0
        %v1672 = vadd.f32 %v1127, %v1671
        %v1673 = vpop.f32.mrb[0].mxu0
        %v1674 = vpop.f32.mrb[0].mxu0
        %v1675 = vadd.f32 %v1127, %v1674
        %v1676 = vpop.f32.mrb[0].mxu0
        %1677 = vmatprep.mubr.bf16.mxu0 0
        %1678 = vmatmul.mubr.bf16.gmra.mrb[0].mxu0 %v1616
        %v1679 = vpop.f32.mrb[0].mxu0
        %v1680 = vadd.f32 %v1127, %v1679
        %v1681 = vpop.f32.mrb[0].mxu0
        %v1682 = vpop.f32.mrb[0].mxu0
        %v1683 = vadd.f32 %v1127, %v1682
        %v1684 = vpop.f32.mrb[0].mxu0
        %1685 = vmatprep.mubr.bf16.mxu0 0
        %1686 = vmatmul.mubr.bf16.gmra.mrb[0].mxu0 %v1617
        %v1687 = vpop.f32.mrb[0].mxu0
        %v1688 = vadd.f32 %v1127, %v1687
        %v1689 = vpop.f32.mrb[0].mxu0
        %v1690 = vpop.f32.mrb[0].mxu0
        %v1691 = vadd.f32 %v1127, %v1690
        %v1692 = vpop.f32.mrb[0].mxu0
        %1693 = vmatprep.mubr.bf16.mxu0 0
        %1694 = vmatmul.mubr.bf16.gmra.mrb[0].mxu0 %v1618
        %v1695 = vpop.f32.mrb[0].mxu0
        %v1696 = vadd.f32 %v1127, %v1695
        %v1697 = vpop.f32.mrb[0].mxu0
        %v1698 = vpop.f32.mrb[0].mxu0
        %v1699 = vadd.f32 %v1127, %v1698
        %v1700 = vpop.f32.mrb[0].mxu0
        %1701 = vmatprep.mubr.bf16.mxu0 0
        %1702 = vmatmul.mubr.bf16.gmra.mrb[0].mxu0 %v1619
        %v1703 = vpop.f32.mrb[0].mxu0
        %v1704 = vadd.f32 %v1127, %v1703
        %v1705 = vpop.f32.mrb[0].mxu0
        %v1706 = vpop.f32.mrb[0].mxu0
        %v1707 = vadd.f32 %v1127, %v1706
        %v1708 = vpop.f32.mrb[0].mxu0
        %1709 = vmatprep.mubr.bf16.mxu0 0
        %1710 = vmatmul.mubr.bf16.gmra.mrb[0].mxu0 %v1620
        %v1711 = vpop.f32.mrb[0].mxu0
        %v1712 = vadd.f32 %v1127, %v1711
        %v1713 = vpop.f32.mrb[0].mxu0
        %v1714 = vpop.f32.mrb[0].mxu0
        %v1715 = vadd.f32 %v1127, %v1714
        %v1716 = vpop.f32.mrb[0].mxu0
        %1717 = vdwg.mxu0
        %1734 = vrot.lane.b32.xlu0 %v500, 124
        %v1735 = vpop.permute.xlu0 %1734
        %1736 = vrot.lane.b32.xlu0 %v501, 124
        %v1737 = vpop.permute.xlu0 %1736
        %1738 = vrot.lane.b32.xlu0 %v502, 124
        %v1739 = vpop.permute.xlu0 %1738
        %1740 = vrot.lane.b32.xlu0 %v503, 124
        %v1741 = vpop.permute.xlu0 %1740
        %1742 = vrot.lane.b32.xlu0 %v504, 124
        %v1743 = vpop.permute.xlu0 %1742
        %1744 = vrot.lane.b32.xlu0 %v505, 124
        %v1745 = vpop.permute.xlu0 %1744
        %1746 = vrot.lane.b32.xlu0 %v506, 124
        %v1747 = vpop.permute.xlu0 %1746
        %1748 = vrot.lane.b32.xlu0 %v507, 124
        %v1749 = vpop.permute.xlu0 %1748
        %1750 = vrot.lane.b32.xlu0 %v508, 124
        %v1751 = vpop.permute.xlu0 %1750
        %1752 = vrot.lane.b32.xlu0 %v509, 124
        %v1753 = vpop.permute.xlu0 %1752
        %1754 = vrot.lane.b32.xlu0 %v510, 124
        %v1755 = vpop.permute.xlu0 %1754
        %1756 = vrot.lane.b32.xlu0 %v511, 124
        %v1757 = vpop.permute.xlu0 %1756
        %1758 = vrot.lane.b32.xlu0 %v512, 124
        %v1759 = vpop.permute.xlu0 %1758
        %1760 = vrot.lane.b32.xlu0 %v513, 124
        %v1761 = vpop.permute.xlu0 %1760
        %1762 = vrot.lane.b32.xlu0 %v514, 124
        %v1763 = vpop.permute.xlu0 %1762
        %1764 = vrot.lane.b32.xlu0 %v515, 124
        %v1765 = vpop.permute.xlu0 %1764
        %v1782 = vmul.f32 %v1656, %v1735
        %v1783 = vmul.f32 %v1659, %v1737
        %v1784 = vmul.f32 %v1664, %v1739
        %v1785 = vmul.f32 %v1667, %v1741
        %v1786 = vmul.f32 %v1672, %v1743
        %v1787 = vmul.f32 %v1675, %v1745
        %v1788 = vmul.f32 %v1680, %v1747
        %v1789 = vmul.f32 %v1683, %v1749
        %v1790 = vmul.f32 %v1688, %v1751
        %v1791 = vmul.f32 %v1691, %v1753
        %v1792 = vmul.f32 %v1696, %v1755
        %v1793 = vmul.f32 %v1699, %v1757
        %v1794 = vmul.f32 %v1704, %v1759
        %v1795 = vmul.f32 %v1707, %v1761
        %v1796 = vmul.f32 %v1712, %v1763
        %v1797 = vmul.f32 %v1715, %v1765
        %v1798 = vsel %vm1290, %v1782, 0.0
        %1799 = vadd.xlane.f32.xlu0 %v1798
        %v1800 = vpop.xlane.xlu0 %1799
        %v1801 = vsel %vm1290, %v1783, 0.0
        %1802 = vadd.xlane.f32.xlu0 %v1801
        %v1803 = vpop.xlane.xlu0 %1802
        %v1804 = vsel %vm1290, %v1784, 0.0
        %1805 = vadd.xlane.f32.xlu0 %v1804
        %v1806 = vpop.xlane.xlu0 %1805
        %v1807 = vsel %vm1290, %v1785, 0.0
        %1808 = vadd.xlane.f32.xlu0 %v1807
        %v1809 = vpop.xlane.xlu0 %1808
        %v1810 = vsel %vm1290, %v1786, 0.0
        %1811 = vadd.xlane.f32.xlu0 %v1810
        %v1812 = vpop.xlane.xlu0 %1811
        %v1813 = vsel %vm1290, %v1787, 0.0
        %1814 = vadd.xlane.f32.xlu0 %v1813
        %v1815 = vpop.xlane.xlu0 %1814
        %v1816 = vsel %vm1290, %v1788, 0.0
        %1817 = vadd.xlane.f32.xlu0 %v1816
        %v1818 = vpop.xlane.xlu0 %1817
        %v1819 = vsel %vm1290, %v1789, 0.0
        %1820 = vadd.xlane.f32.xlu0 %v1819
        %v1821 = vpop.xlane.xlu0 %1820
        %v1822 = vsel %vm1290, %v1790, 0.0
        %1823 = vadd.xlane.f32.xlu0 %v1822
        %v1824 = vpop.xlane.xlu0 %1823
        %v1825 = vsel %vm1290, %v1791, 0.0
        %1826 = vadd.xlane.f32.xlu0 %v1825
        %v1827 = vpop.xlane.xlu0 %1826
        %v1828 = vsel %vm1290, %v1792, 0.0
        %1829 = vadd.xlane.f32.xlu0 %v1828
        %v1830 = vpop.xlane.xlu0 %1829
        %v1831 = vsel %vm1290, %v1793, 0.0
        %1832 = vadd.xlane.f32.xlu0 %v1831
        %v1833 = vpop.xlane.xlu0 %1832
        %v1834 = vsel %vm1290, %v1794, 0.0
        %1835 = vadd.xlane.f32.xlu0 %v1834
        %v1836 = vpop.xlane.xlu0 %1835
        %v1837 = vsel %vm1290, %v1795, 0.0
        %1838 = vadd.xlane.f32.xlu0 %v1837
        %v1839 = vpop.xlane.xlu0 %1838
        %v1840 = vsel %vm1290, %v1796, 0.0
        %1841 = vadd.xlane.f32.xlu0 %v1840
        %v1842 = vpop.xlane.xlu0 %1841
        %v1843 = vsel %vm1290, %v1797, 0.0
        %1844 = vadd.xlane.f32.xlu0 %v1843
        %v1845 = vpop.xlane.xlu0 %1844
        %v1846 = vadd.f32 %v1293, %v1800
        %v1847 = vadd.f32 %v1296, %v1803
        %v1848 = vadd.f32 %v1299, %v1806
        %v1849 = vadd.f32 %v1302, %v1809
        %v1850 = vadd.f32 %v1305, %v1812
        %v1851 = vadd.f32 %v1308, %v1815
        %v1852 = vadd.f32 %v1311, %v1818
        %v1853 = vadd.f32 %v1314, %v1821
        %v1854 = vadd.f32 %v1317, %v1824
        %v1855 = vadd.f32 %v1320, %v1827
        %v1856 = vadd.f32 %v1323, %v1830
        %v1857 = vadd.f32 %v1326, %v1833
        %v1858 = vadd.f32 %v1329, %v1836
        %v1859 = vadd.f32 %v1332, %v1839
        %v1860 = vadd.f32 %v1335, %v1842
        %v1861 = vadd.f32 %v1338, %v1845
        %vm1862 = vcmask 7168
        %1863 = vst.msk [vmem:[%s424] sm:$0xff] %vm1862, %v1846
        %1864 = vst.msk [vmem:[%s424 + $0x8] sm:$0xff] %vm1862, %v1847
        %1865 = vst.msk [vmem:[%s424 + $0x10] sm:$0xff] %vm1862, %v1848
        %1866 = vst.msk [vmem:[%s424 + $0x18] sm:$0xff] %vm1862, %v1849
        %1867 = vst.msk [vmem:[%s424 + $0x20] sm:$0xff] %vm1862, %v1850
        %1868 = vst.msk [vmem:[%s424 + $0x28] sm:$0xff] %vm1862, %v1851
        %1869 = vst.msk [vmem:[%s424 + $0x30] sm:$0xff] %vm1862, %v1852
        %1870 = vst.msk [vmem:[%s424 + $0x38] sm:$0xff] %vm1862, %v1853
        %1871 = vst.msk [vmem:[%s424 + $0x40] sm:$0xff] %vm1862, %v1854
        %1872 = vst.msk [vmem:[%s424 + $0x48] sm:$0xff] %vm1862, %v1855
        %1873 = vst.msk [vmem:[%s424 + $0x50] sm:$0xff] %vm1862, %v1856
        %1874 = vst.msk [vmem:[%s424 + $0x58] sm:$0xff] %vm1862, %v1857
        %1875 = vst.msk [vmem:[%s424 + $0x60] sm:$0xff] %vm1862, %v1858
        %1876 = vst.msk [vmem:[%s424 + $0x68] sm:$0xff] %vm1862, %v1859
        %1877 = vst.msk [vmem:[%s424 + $0x70] sm:$0xff] %vm1862, %v1860
        %1878 = vst.msk [vmem:[%s424 + $0x78] sm:$0xff] %vm1862, %v1861
        %s1879 = sand.u32 %s256, 1
        %s1880 = sand.u32 %s256, 1
        %s1881 = smul.addr %s1880, 128
        %s1882 = scalar_lea.vmem [#allocation3], %s1881
        // Predicated region
        $region61: #{lig_linear_forward.1} parent=59 // pred_check
          %p1883 = pneg %p266
        $region62: #{lig_linear_forward.1} parent=59 // pred_check_branch
          %1885 = sbr.rel (%p1883) target = $region64
        $region63: #{lig_linear_forward.1} parent=59 // pred_region
          %s1886 = smul.u32 16, %s23
          %s1887 = ssub.s32 25, %s1886
          %p1888 = scmp.lt.s32.totalorder %s1887, 16
          %s1889 = scalar_select %p1888, %s1887, 16
          %s1890 = smul.u32 128, %s1889
          %p1891 = scmp.ne.s32.totalorder 0, %s1890
          %s1892 = smul.addr %s1886, 8
          %s1893 = scalar_lea.vmem %s10, %s1892
          // Predicated region
          $region65: #{lig_linear_forward.1} parent=63 // pred_check
            %p1894 = pneg %p1891
          $region66: #{lig_linear_forward.1} parent=63 // pred_check_branch
            %1896 = sbr.rel (%p1894) target = $region68
          $region67: #{lig_linear_forward.1} parent=63 // pred_region
            // Predicated region
            $region69: #{lig_linear_forward.1} parent=67 // pred_check
              _
            $region70: #{lig_linear_forward.1} parent=67 // pred_check_branch
              %1898 = sbr.rel (0) target = $region72
            $region71: #{lig_linear_forward.1} parent=67 // pred_region
              // Predicated region
              $region91: #{lig_linear_forward.1} parent=71 // pred_check
                _
              $region92: #{lig_linear_forward.1} parent=71 // pred_check_branch
                %1977 = sbr.rel (0) target = $region94
              $region93: #{lig_linear_forward.1} parent=71 // pred_region
                %s1978 = sshrl.u32 %s1889, 4
                // While loop
                $region95: #{lig_linear_forward.1} parent=93 // loop_pre_header
                  _
                $region96: #{lig_linear_forward.1} parent=93 // loop_header
                  %s1980 = sphi 0, %s1982
                  %p1981 = scmp.ge.s32.totalorder %s1980, %s1978
                  %s1985 = sphi 0, %s2022
                  %s1986 = sphi %s1882, %s2025
                  %s1987 = sphi %s1893, %s2026
                $region97: #{lig_linear_forward.1} parent=93 // loop_header_branch
                  %1984 = sbr.rel (%p1981) target = $region101
                $region98: #{lig_linear_forward.1} parent=93 // loop_body
                  %v1988 = vld [vmem:[%s1986] sm:$0xff]
                  %1989 = vst [vmem:[%s1987] sm:$0xff] %v1988
                  %v1990 = vld [vmem:[%s1986 + $0x8] sm:$0xff]
                  %1991 = vst [vmem:[%s1987 + $0x8] sm:$0xff] %v1990
                  %v1992 = vld [vmem:[%s1986 + $0x10] sm:$0xff]
                  %1993 = vst [vmem:[%s1987 + $0x10] sm:$0xff] %v1992
                  %v1994 = vld [vmem:[%s1986 + $0x18] sm:$0xff]
                  %1995 = vst [vmem:[%s1987 + $0x18] sm:$0xff] %v1994
                  %v1996 = vld [vmem:[%s1986 + $0x20] sm:$0xff]
                  %1997 = vst [vmem:[%s1987 + $0x20] sm:$0xff] %v1996
                  %v1998 = vld [vmem:[%s1986 + $0x28] sm:$0xff]
                  %1999 = vst [vmem:[%s1987 + $0x28] sm:$0xff] %v1998
                  %v2000 = vld [vmem:[%s1986 + $0x30] sm:$0xff]
                  %2001 = vst [vmem:[%s1987 + $0x30] sm:$0xff] %v2000
                  %v2002 = vld [vmem:[%s1986 + $0x38] sm:$0xff]
                  %2003 = vst [vmem:[%s1987 + $0x38] sm:$0xff] %v2002
                  %v2004 = vld [vmem:[%s1986 + $0x40] sm:$0xff]
                  %2005 = vst [vmem:[%s1987 + $0x40] sm:$0xff] %v2004
                  %v2006 = vld [vmem:[%s1986 + $0x48] sm:$0xff]
                  %2007 = vst [vmem:[%s1987 + $0x48] sm:$0xff] %v2006
                  %v2008 = vld [vmem:[%s1986 + $0x50] sm:$0xff]
                  %2009 = vst [vmem:[%s1987 + $0x50] sm:$0xff] %v2008
                  %v2010 = vld [vmem:[%s1986 + $0x58] sm:$0xff]
                  %2011 = vst [vmem:[%s1987 + $0x58] sm:$0xff] %v2010
                  %v2012 = vld [vmem:[%s1986 + $0x60] sm:$0xff]
                  %2013 = vst [vmem:[%s1987 + $0x60] sm:$0xff] %v2012
                  %v2014 = vld [vmem:[%s1986 + $0x68] sm:$0xff]
                  %2015 = vst [vmem:[%s1987 + $0x68] sm:$0xff] %v2014
                  %v2016 = vld [vmem:[%s1986 + $0x70] sm:$0xff]
                  %2017 = vst [vmem:[%s1987 + $0x70] sm:$0xff] %v2016
                  %v2018 = vld [vmem:[%s1986 + $0x78] sm:$0xff]
                  %2019 = vst [vmem:[%s1987 + $0x78] sm:$0xff] %v2018
                  %s2020 = sadd.s32 1, %s1985
                  %p2021 = scmp.ge.s32.totalorder %s2020, %s1978
                  %s2022 = scalar_select %p2021, 0, %s2020
                  %s2023 = smul.u32 %s2022, 128
                  %s2024 = smul.u32 %s2022, 128
                  %s2025 = scalar_lea.vmem %s1882, %s2023 [#allocation3]
                  %s2026 = scalar_lea.vmem %s1893, %s2024
                $region99: #{lig_linear_forward.1} parent=93 // loop_footer
                  %s1982 = sadd.s32 %s1980, 1
                $region100: #{lig_linear_forward.1} parent=93 // loop_footer_branch
                  %1979 = sbr.rel target = $region96
                $region101: #{lig_linear_forward.1} parent=93 // loop_exit
                  _
                %s2027 = sshrl.u32 %s1889, 4
                %s2028 = sand.u32 %s1889, 15
                %s2029 = smul.u32 %s2027, 16
                %s2030 = smul.u32 8, %s2029
                %s2031 = scalar_lea.vmem %s1882, %s2030 [#allocation3]
                %s2032 = smul.u32 8, %s2029
                %s2033 = scalar_lea.vmem %s1893, %s2032
                // While loop
                $region102: #{lig_linear_forward.1} parent=93 // loop_pre_header
                  _
                $region103: #{lig_linear_forward.1} parent=93 // loop_header
                  %s2035 = sphi 0, %s2037
                  %p2036 = scmp.ge.s32.totalorder %s2035, %s2028
                  %s2040 = sphi 0, %s2047
                  %s2041 = sphi %s2031, %s2050
                  %s2042 = sphi %s2033, %s2051
                $region104: #{lig_linear_forward.1} parent=93 // loop_header_branch
                  %2039 = sbr.rel (%p2036) target = $region108
                $region105: #{lig_linear_forward.1} parent=93 // loop_body
                  %v2043 = vld [vmem:[%s2041] sm:$0xff]
                  %2044 = vst [vmem:[%s2042] sm:$0xff] %v2043
                  %s2045 = sadd.s32 1, %s2040
                  %p2046 = scmp.ge.s32.totalorder %s2045, %s2028
                  %s2047 = scalar_select %p2046, 0, %s2045
                  %s2048 = smul.u32 %s2047, 8
                  %s2049 = smul.u32 %s2047, 8
                  %s2050 = scalar_lea.vmem %s2031, %s2048 [#allocation3]
                  %s2051 = scalar_lea.vmem %s2033, %s2049
                $region106: #{lig_linear_forward.1} parent=93 // loop_footer
                  %s2037 = sadd.s32 %s2035, 1
                $region107: #{lig_linear_forward.1} parent=93 // loop_footer_branch
                  %2034 = sbr.rel target = $region103
                $region108: #{lig_linear_forward.1} parent=93 // loop_exit
                  _
              $region94: #{lig_linear_forward.1} parent=71 // pred_fallthru
                _
              // Predicated region
              $region109: #{lig_linear_forward.1} parent=71 // pred_check
                _
              $region110: #{lig_linear_forward.1} parent=71 // pred_check_branch
                %2053 = sbr.rel target = $region112
              $region111: #{lig_linear_forward.1} parent=71 // pred_region
                _
              $region112: #{lig_linear_forward.1} parent=71 // pred_fallthru
                _
            $region72: #{lig_linear_forward.1} parent=67 // pred_fallthru
              _
            // Predicated region
            $region73: #{lig_linear_forward.1} parent=67 // pred_check
              _
            $region74: #{lig_linear_forward.1} parent=67 // pred_check_branch
              %1900 = sbr.rel target = $region76
            $region75: #{lig_linear_forward.1} parent=67 // pred_region
              %s1902 = sshrl.u32 %s1889, 4
              // While loop
              $region77: #{lig_linear_forward.1} parent=75 // loop_pre_header
                _
              $region78: #{lig_linear_forward.1} parent=75 // loop_header
                %s1904 = sphi 0, %s1906
                %p1905 = scmp.ge.s32.totalorder %s1904, %s1902
                %s1909 = sphi 0, %s1946
                %s1910 = sphi %s1882, %s1949
                %s1911 = sphi %s1893, %s1950
              $region79: #{lig_linear_forward.1} parent=75 // loop_header_branch
                %1908 = sbr.rel (%p1905) target = $region83
              $region80: #{lig_linear_forward.1} parent=75 // loop_body
                %v1912 = vld [vmem:[%s1910] sm:$0xff]
                %1913 = vst [vmem:[%s1911] sm:$0xff] %v1912
                %v1914 = vld [vmem:[%s1910 + $0x8] sm:$0xff]
                %1915 = vst [vmem:[%s1911 + $0x8] sm:$0xff] %v1914
                %v1916 = vld [vmem:[%s1910 + $0x10] sm:$0xff]
                %1917 = vst [vmem:[%s1911 + $0x10] sm:$0xff] %v1916
                %v1918 = vld [vmem:[%s1910 + $0x18] sm:$0xff]
                %1919 = vst [vmem:[%s1911 + $0x18] sm:$0xff] %v1918
                %v1920 = vld [vmem:[%s1910 + $0x20] sm:$0xff]
                %1921 = vst [vmem:[%s1911 + $0x20] sm:$0xff] %v1920
                %v1922 = vld [vmem:[%s1910 + $0x28] sm:$0xff]
                %1923 = vst [vmem:[%s1911 + $0x28] sm:$0xff] %v1922
                %v1924 = vld [vmem:[%s1910 + $0x30] sm:$0xff]
                %1925 = vst [vmem:[%s1911 + $0x30] sm:$0xff] %v1924
                %v1926 = vld [vmem:[%s1910 + $0x38] sm:$0xff]
                %1927 = vst [vmem:[%s1911 + $0x38] sm:$0xff] %v1926
                %v1928 = vld [vmem:[%s1910 + $0x40] sm:$0xff]
                %1929 = vst [vmem:[%s1911 + $0x40] sm:$0xff] %v1928
                %v1930 = vld [vmem:[%s1910 + $0x48] sm:$0xff]
                %1931 = vst [vmem:[%s1911 + $0x48] sm:$0xff] %v1930
                %v1932 = vld [vmem:[%s1910 + $0x50] sm:$0xff]
                %1933 = vst [vmem:[%s1911 + $0x50] sm:$0xff] %v1932
                %v1934 = vld [vmem:[%s1910 + $0x58] sm:$0xff]
                %1935 = vst [vmem:[%s1911 + $0x58] sm:$0xff] %v1934
                %v1936 = vld [vmem:[%s1910 + $0x60] sm:$0xff]
                %1937 = vst [vmem:[%s1911 + $0x60] sm:$0xff] %v1936
                %v1938 = vld [vmem:[%s1910 + $0x68] sm:$0xff]
                %1939 = vst [vmem:[%s1911 + $0x68] sm:$0xff] %v1938
                %v1940 = vld [vmem:[%s1910 + $0x70] sm:$0xff]
                %1941 = vst [vmem:[%s1911 + $0x70] sm:$0xff] %v1940
                %v1942 = vld [vmem:[%s1910 + $0x78] sm:$0xff]
                %1943 = vst [vmem:[%s1911 + $0x78] sm:$0xff] %v1942
                %s1944 = sadd.s32 1, %s1909
                %p1945 = scmp.ge.s32.totalorder %s1944, %s1902
                %s1946 = scalar_select %p1945, 0, %s1944
                %s1947 = smul.u32 %s1946, 128
                %s1948 = smul.u32 %s1946, 128
                %s1949 = scalar_lea.vmem %s1882, %s1947 [#allocation3]
                %s1950 = scalar_lea.vmem %s1893, %s1948
              $region81: #{lig_linear_forward.1} parent=75 // loop_footer
                %s1906 = sadd.s32 %s1904, 1
              $region82: #{lig_linear_forward.1} parent=75 // loop_footer_branch
                %1903 = sbr.rel target = $region78
              $region83: #{lig_linear_forward.1} parent=75 // loop_exit
                _
              %s1951 = sshrl.u32 %s1889, 4
              %s1952 = sand.u32 %s1889, 15
              %s1953 = smul.u32 %s1951, 16
              %s1954 = smul.u32 8, %s1953
              %s1955 = scalar_lea.vmem %s1882, %s1954 [#allocation3]
              %s1956 = smul.u32 8, %s1953
              %s1957 = scalar_lea.vmem %s1893, %s1956
              // While loop
              $region84: #{lig_linear_forward.1} parent=75 // loop_pre_header
                _
              $region85: #{lig_linear_forward.1} parent=75 // loop_header
                %s1959 = sphi 0, %s1961
                %p1960 = scmp.ge.s32.totalorder %s1959, %s1952
                %s1964 = sphi 0, %s1971
                %s1965 = sphi %s1955, %s1974
                %s1966 = sphi %s1957, %s1975
              $region86: #{lig_linear_forward.1} parent=75 // loop_header_branch
                %1963 = sbr.rel (%p1960) target = $region90
              $region87: #{lig_linear_forward.1} parent=75 // loop_body
                %v1967 = vld [vmem:[%s1965] sm:$0xff]
                %1968 = vst [vmem:[%s1966] sm:$0xff] %v1967
                %s1969 = sadd.s32 1, %s1964
                %p1970 = scmp.ge.s32.totalorder %s1969, %s1952
                %s1971 = scalar_select %p1970, 0, %s1969
                %s1972 = smul.u32 %s1971, 8
                %s1973 = smul.u32 %s1971, 8
                %s1974 = scalar_lea.vmem %s1955, %s1972 [#allocation3]
                %s1975 = scalar_lea.vmem %s1957, %s1973
              $region88: #{lig_linear_forward.1} parent=75 // loop_footer
                %s1961 = sadd.s32 %s1959, 1
              $region89: #{lig_linear_forward.1} parent=75 // loop_footer_branch
                %1958 = sbr.rel target = $region85
              $region90: #{lig_linear_forward.1} parent=75 // loop_exit
                _
            $region76: #{lig_linear_forward.1} parent=67 // pred_fallthru
              _
          $region68: #{lig_linear_forward.1} parent=63 // pred_fallthru
            _
          %2054 = vnop
        $region64: #{lig_linear_forward.1} parent=59 // pred_fallthru
          _
      $region60: #{lig_linear_forward.1} parent=5 // pred_fallthru
        _
      %p2055 = scmp.le.s32.totalorder 2, %s18
      // Predicated region
      $region113: #{lig_linear_forward.1} parent=5 // pred_check
        %p2056 = pneg %p2055
      $region114: #{lig_linear_forward.1} parent=5 // pred_check_branch
        %2058 = sbr.rel (%p2056) target = $region116
      $region115: #{lig_linear_forward.1} parent=5 // pred_region
        %s2059 = ssub.s32 %s18, 2
        // Predicated region
        $region117: #{lig_linear_forward.1} parent=115 // pred_check
          %p2060 = pneg %p272
        $region118: #{lig_linear_forward.1} parent=115 // pred_check_branch
          %2062 = sbr.rel (%p2060) target = $region120
        $region119: #{lig_linear_forward.1} parent=115 // pred_region
          %s2063 = sand.u32 %s257, 1
          %s2064 = sand.u32 %s257, 1
          %s2065 = smul.addr %s2064, 128
          %s2066 = scalar_lea.vmem [#allocation3], %s2065
        $region120: #{lig_linear_forward.1} parent=115 // pred_fallthru
          _
      $region116: #{lig_linear_forward.1} parent=5 // pred_fallthru
        _
    $region6: #{lig_linear_forward.1} parent=1 // loop_footer
      %s22 = sadd.s32 1, %s18
    $region7: #{lig_linear_forward.1} parent=1 // loop_footer_branch
      %17 = sbr.rel target = $region3
    $region8: #{lig_linear_forward.1} parent=1 // loop_exit
      _

</llo_original>
